<compile_context>
chip_gen: v5e
topology: v5e:2x2
jax: 0.10.0
libtpu: 0.0.40
codegen_flags: <defaults>
</compile_context>

<pallas_src>
import functools

import jax
import jax.numpy as jnp
import numpy as np
from jax.experimental import pallas as pl
from jax.experimental.pallas import tpu as pltpu

NETWORK_CHANNELS = (512, 256, 128, 64, 32)  # hardcoded in the PyTorch module


# ----------------------------------------------------------------------------
# VMEM-aware tiling helpers
# ----------------------------------------------------------------------------
def _vmem_caps():
    """Return (vmem_limit_bytes, tile_budget_bytes) for this TPU generation.
    v5e/v6e have 128 MiB physical VMEM, v7x only 64 MiB; fall back to the
    conservative 64 MiB if the query is unavailable."""
    try:
        cap = int(pltpu.get_tpu_info().vmem_capacity_bytes)
    except Exception:
        cap = 64 << 20
    limit = max(32 << 20, cap - (16 << 20))    # leave compiler headroom
    budget = max(24 << 20, limit - (8 << 20))  # what tiles are planned against
    return limit, budget


def _pick_batch_tile(B, T, per_row_bytes, fixed_bytes, budget_bytes):
    """Largest divisor BB of B whose per-tile VMEM footprint
    (fixed + BB * per_row) fits the budget.  Bigger tiles amortize the
    per-step weight DMA and the ~0.35us per-grid-step overhead."""
    if B <= 1:
        return 1
    if T % 8 != 0:
        return 1  # keep the (BB, T, C) -> (BB*T, C) reshape sublane-aligned
    fit = max(1, int((budget_bytes - fixed_bytes) // max(1, per_row_bytes)))
    bb = min(B, fit)
    while B % bb:
        bb -= 1
    return bb


# ----------------------------------------------------------------------------
# Small in-kernel helpers
# ----------------------------------------------------------------------------
def _stage_padded(pad_ref, x, P, T):
    """Write x (BB, T, C) into the middle of the (BB, T+2P, C) scratch and zero
    the halo rows (in-kernel zero padding -- no padded HBM copy).  Also casts
    x to the scratch dtype (bf16), so the HBM block can stay in native dtype."""
    bb, _, c = pad_ref.shape
    zeros = jnp.zeros((bb, P, c), pad_ref.dtype)
    pad_ref[:, :P, :] = zeros
    pad_ref[:, P + T:, :] = zeros
    pad_ref[:, P:P + T, :] = x.astype(pad_ref.dtype)


def _conv_from_padded(pad_ref, get_w, K, T, cin, cout, bb):
    """Conv1d as a sum over K taps of a single (BB*T, Cin) @ (Cin, Cout) MXU
    matmul per tap (batch folded into M).  f32 accumulation."""
    conv = jnp.zeros((bb * T, cout), jnp.float32)
    for k in range(K):  # K is small and static
        xk = pad_ref[:, k:k + T, :].reshape(bb * T, cin)
        conv = conv + jnp.dot(xk, get_w(k), preferred_element_type=jnp.float32)
    return conv.reshape(bb, T, cout)


# ----------------------------------------------------------------------------
# Kernels
# ----------------------------------------------------------------------------
def readout_combine_kernel(x_ref, w_ref, b_ref, s_ref, o_ref, xp_ref, acc_ref,
                           *, K, P, T):
    """Grid = (batch_tiles, L).  Per step: conv1d(k=K) + bias + ReLU for layer i
    of this batch tile, scaled by the layer-mixing weight, accumulated into the
    resident f32 accumulator; bf16 result written on the last layer."""
    i = pl.program_id(1)
    BB, _, C = xp_ref.shape

    @pl.when(i == 0)
    def _init():
        acc_ref[...] = jnp.zeros_like(acc_ref)

    _stage_padded(xp_ref, x_ref[0], P, T)           # native-dtype block -> bf16
    conv = _conv_from_padded(xp_ref, lambda k: w_ref[0, k], K, T, C, C, BB)
    y = jnp.maximum(conv + b_ref[0], 0.0)           # conv bias + ReLU (f32)
    acc_ref[...] += s_ref[i] * y                    # weighted sum over layers

    @pl.when(i == pl.num_programs(1) - 1)
    def _store():
        o_ref[...] = acc_ref[...].astype(o_ref.dtype)


def network_tail_kernel(*refs, T, n_conv):
    """Fused conv stack (n_conv Conv1d(k=3)+ReLU) + Linear(C_last, 1).
    refs = [x, (w,b)*n_conv, wo, bo, out, pad_scratch*n_conv]."""
    x_ref = refs[0]
    conv_refs = refs[1:1 + 2 * n_conv]
    wo_ref = refs[1 + 2 * n_conv]
    bo_ref = refs[2 + 2 * n_conv]
    o_ref = refs[3 + 2 * n_conv]
    pad_refs = refs[4 + 2 * n_conv:]

    h = x_ref[...]                                   # (BB, T, Cin)
    for l in range(n_conv):
        w_ref = conv_refs[2 * l]
        b_ref = conv_refs[2 * l + 1]
        pad_ref = pad_refs[l]
        K, Cin, Cout = w_ref.shape
        P = (K - 1) // 2
        BB = pad_ref.shape[0]
        _stage_padded(pad_ref, h, P, T)
        conv = _conv_from_padded(pad_ref, lambda k, w=w_ref: w[k],
                                 K, T, Cin, Cout, BB)
        h = jnp.maximum(conv + b_ref[...], 0.0).astype(jnp.bfloat16)

    # Linear(C_last, 1) on the VPU: multiply + lane reduction instead of a
    # degenerate N=1 MXU matmul.  Lane-dense (BB, T) store when the out ref is
    # 2-D, lane-sparse (BB, T, 1) fallback otherwise.
    wo = wo_ref[...]                                 # (1, C_last) f32
    out = jnp.sum(h.astype(jnp.float32) * wo[None, :, :], axis=-1) + bo_ref[...]
    if len(o_ref.shape) == 2:
        o_ref[...] = out.astype(o_ref.dtype)
    else:
        o_ref[...] = out[..., None].astype(o_ref.dtype)


def linear_rowsum_kernel(x_ref, w_ref, b_ref, o_ref):
    """Linear(C, 1) as a VPU multiply + lane reduction (finetune head).
    Input block is read in its native dtype and upcast in-kernel."""
    x = x_ref[...].astype(jnp.float32)               # (BB, T, C)
    w = w_ref[...]                                   # (1, C) f32
    out = jnp.sum(x * w[None, :, :], axis=-1) + b_ref[...]   # (BB, T)
    if len(o_ref.shape) == 2:
        o_ref[...] = out.astype(o_ref.dtype)
    else:
        o_ref[...] = out[..., None].astype(o_ref.dtype)


# ----------------------------------------------------------------------------
# Wrappers
# ----------------------------------------------------------------------------
def readout_combine(x, w_kic, b, s, *, block_b=None):
    """x: (L, B, T, C) native dtype; w_kic: (L, K, Cin, Cout) bf16 (prepared);
    b: (L, 1, C) f32; s: (L,) f32.  Returns sum_i s_i * ReLU(conv_i(x_i)) as
    (B, T, C) bf16."""
    L, B, T, C = x.shape
    K = w_kic.shape[1]
    P = (K - 1) // 2
    limit, budget = _vmem_caps()

    itemsize = jnp.dtype(x.dtype).itemsize
    per_row = (2 * T * C * itemsize        # x block, double-buffered
               + (T + 2 * P) * C * 2       # bf16 pad scratch
               + T * C * 4                 # resident f32 accumulator
               + 2 * T * C * 2)            # bf16 output block, double-buffered
    fixed = 2 * K * C * C * 2 + 2 * C * 4 + (2 << 20)  # weights (db) + bias + slack
    BB = block_b if block_b is not None else _pick_batch_tile(B, T, per_row,
                                                              fixed, budget)
    assert B % BB == 0, f"batch tile {BB} must divide batch {B}"
    # TODO(synk): on v7x (2 TCs) prefer B//BB >= 2 so the parallel batch axis
    # feeds both cores; requires a reliable core-count query.

    kernel = functools.partial(readout_combine_kernel, K=K, P=P, T=T)
    return pl.pallas_call(
        kernel,
        out_shape=jax.ShapeDtypeStruct((B, T, C), jnp.bfloat16),
        grid=(B // BB, L),
        in_specs=[
            pl.BlockSpec((1, BB, T, C), lambda bt, i: (i, bt, 0, 0)),
            pl.BlockSpec((1, K, C, C), lambda bt, i: (i, 0, 0, 0)),
            pl.BlockSpec((1, 1, C), lambda bt, i: (i, 0, 0)),
            pl.BlockSpec(memory_space=pltpu.MemorySpace.SMEM),  # layer scales
        ],
        out_specs=pl.BlockSpec((BB, T, C), lambda bt, i: (bt, 0, 0)),
        scratch_shapes=[pltpu.VMEM((BB, T + 2 * P, C), jnp.bfloat16),
                        pltpu.VMEM((BB, T, C), jnp.float32)],
        compiler_params=pltpu.CompilerParams(
            dimension_semantics=("parallel", "arbitrary"),  # L stays arbitrary!
            vmem_limit_bytes=limit),
    )(x, w_kic, b, s)


def network_tail(h, net_ws, net_bs, out_w, out_b, *, block_b=None):
    """Fused network (conv stack + ReLU) + out Linear.  h: (B, T, C) ->
    (B, T, 1) f32.  Weights already in kernel layout/dtype (prepared);
    intermediates stay in VMEM."""
    B, T, C = h.shape
    n_conv = len(net_ws)
    limit, budget = _vmem_caps()

    itemsize = jnp.dtype(h.dtype).itemsize
    c_max = max(int(w.shape[2]) for w in net_ws)
    fixed = 2 * sum(int(w.size) * 2 + int(bb_.size) * 4
                    for w, bb_ in zip(net_ws, net_bs)) + (1 << 20)
    per_row = (2 * T * C * itemsize
               + sum((T + int(w.shape[0]) - 1) * int(w.shape[1]) * 2
                     for w in net_ws)
               + T * c_max * 6              # live f32 conv + bf16 h temporaries
               + 2 * T * 4)
    BB = block_b if block_b is not None else _pick_batch_tile(B, T, per_row,
                                                              fixed, budget)
    assert B % BB == 0, f"batch tile {BB} must divide batch {B}"
    dense_out = (BB % 8 == 0) or (BB == B)   # lane-dense store needs 8-aligned BB

    args = [h]
    in_specs = [pl.BlockSpec((BB, T, C), lambda bt: (bt, 0, 0))]
    scratch = []
    for w, bias in zip(net_ws, net_bs):
        k, cin, cout = w.shape
        args += [w, bias]
        in_specs += [pl.BlockSpec((k, cin, cout), lambda bt: (0, 0, 0)),
                     pl.BlockSpec((1, cout), lambda bt: (0, 0))]
        scratch.append(pltpu.VMEM((BB, T + k - 1, cin), jnp.bfloat16))
    c_last = out_w.shape[1]
    args += [out_w, out_b]
    in_specs += [pl.BlockSpec((1, c_last), lambda bt: (0, 0)),
                 pl.BlockSpec((1, 1), lambda bt: (0, 0))]

    if dense_out:
        out_shape = jax.ShapeDtypeStruct((B, T), jnp.float32)
        out_specs = pl.BlockSpec((BB, T), lambda bt: (bt, 0))
    else:
        out_shape = jax.ShapeDtypeStruct((B, T, 1), jnp.float32)
        out_specs = pl.BlockSpec((BB, T, 1), lambda bt: (bt, 0, 0))

    kernel = functools.partial(network_tail_kernel, T=T, n_conv=n_conv)
    out = pl.pallas_call(
        kernel,
        out_shape=out_shape,
        grid=(B // BB,),
        in_specs=in_specs,
        out_specs=out_specs,
        scratch_shapes=scratch,
        compiler_params=pltpu.CompilerParams(
            dimension_semantics=("parallel",), vmem_limit_bytes=limit),
    )(*args)
    return out.reshape(B, T, 1)


def linear_rowsum(x, w, b, *, block_b=None):
    """Finetune head.  x: (B, T, C) in its native dtype (cast in-kernel);
    w: (1, C) f32; b: (1, 1) f32 -> (B, T, 1) f32."""
    B, T, C = x.shape
    limit, budget = _vmem_caps()

    itemsize = jnp.dtype(x.dtype).itemsize
    per_row = 2 * T * C * itemsize + T * C * 4 + 2 * T * 4
    fixed = 2 * C * 4 + (1 << 20)
    BB = block_b if block_b is not None else _pick_batch_tile(B, T, per_row,
                                                              fixed, budget)
    assert B % BB == 0, f"batch tile {BB} must divide batch {B}"
    dense_out = (BB % 8 == 0) or (BB == B)

    if dense_out:
        out_shape = jax.ShapeDtypeStruct((B, T), jnp.float32)
        out_specs = pl.BlockSpec((BB, T), lambda i: (i, 0))
    else:
        out_shape = jax.ShapeDtypeStruct((B, T, 1), jnp.float32)
        out_specs = pl.BlockSpec((BB, T, 1), lambda i: (i, 0, 0))

    out = pl.pallas_call(
        linear_rowsum_kernel,
        out_shape=out_shape,
        grid=(B // BB,),
        in_specs=[
            pl.BlockSpec((BB, T, C), lambda i: (i, 0, 0)),
            pl.BlockSpec((1, C), lambda i: (0, 0)),
            pl.BlockSpec((1, 1), lambda i: (0, 0)),
        ],
        out_specs=out_specs,
        compiler_params=pltpu.CompilerParams(
            dimension_semantics=("parallel",), vmem_limit_bytes=limit),
    )(x, w, b)
    return out.reshape(B, T, 1)


# ----------------------------------------------------------------------------
# Classifier: deterministic parameter init + one-time prep + forward
# ----------------------------------------------------------------------------
def init_params(key, mode='finetune', n_layers=24, input_size=768):
    """PyTorch-layout parameters (Conv1d weights as (Cout, Cin, K))."""
    keys = iter(jax.random.split(key, 64))

    def draw(shape, scale):
        return jax.random.normal(next(keys), shape, jnp.float32) * scale

    params = {'mode': mode}
    if mode == 'readout':
        # torch.ones(n_layers,1,1,1)/n_layers, stored flattened to (n_layers,)
        params['weight'] = jnp.full((n_layers,), 1.0 / n_layers, jnp.float32)
        params['layerwise'] = []
        for _ in range(n_layers):
            s = 1.0 / np.sqrt(input_size * 9)
            params['layerwise'].append({
                'w': draw((input_size, input_size, 9), s),   # Conv1d(C, C, 9)
                'b': draw((input_size,), s)})
        params['network'] = []
        cin = input_size
        for cout in NETWORK_CHANNELS:
            s = 1.0 / np.sqrt(cin * 3)
            params['network'].append({'w': draw((cout, cin, 3), s),
                                      'b': draw((cout,), s)})
            cin = cout
        s = 1.0 / np.sqrt(32)
        params['out'] = {'w': draw((1, 32), s), 'b': draw((1,), s)}
    else:  # finetune: nn.Linear(768, 1) (hardcoded in the module)
        s = 1.0 / np.sqrt(768)
        params['out'] = {'w': draw((1, 768), s), 'b': draw((1,), s)}
    return params


def prepare_params(params):
    """One-time conversion of PyTorch-layout params into kernel layout/dtype.
    Hoisted out of the forward pass so no per-call weight stack/transpose/cast
    traffic is generated."""
    if params['mode'] == 'readout':
        conv_ws = jnp.stack([p['w'] for p in params['layerwise']])   # (L,C,C,K)
        conv_bs = jnp.stack([p['b'] for p in params['layerwise']])   # (L,C)
        kp = {
            'mode': 'readout',
            'scales': params['weight'].reshape(-1).astype(jnp.float32),
            'ro_w': jnp.transpose(conv_ws, (0, 3, 2, 1)).astype(jnp.bfloat16),
            'ro_b': conv_bs[:, None, :].astype(jnp.float32),          # (L,1,C)
            'net_w': [jnp.transpose(l['w'], (2, 1, 0)).astype(jnp.bfloat16)
                      for l in params['network']],                    # (K,Cin,Cout)
            'net_b': [l['b'].reshape(1, -1).astype(jnp.float32)
                      for l in params['network']],
            'out_w': params['out']['w'].reshape(1, -1).astype(jnp.float32),
            'out_b': params['out']['b'].reshape(1, 1).astype(jnp.float32),
        }
    else:
        kp = {'mode': 'finetune',
              'out_w': params['out']['w'].reshape(1, -1).astype(jnp.float32),
              'out_b': params['out']['b'].reshape(1, 1).astype(jnp.float32)}
    return jax.tree_util.tree_map(lambda a: a, kp)


def classifier_forward(kparams, x, *, block_b=None):
    if kparams['mode'] == 'readout':
        # x: (n_layers, B, T, input_size) -> (B, T, 1)
        h = readout_combine(x, kparams['ro_w'], kparams['ro_b'],
                            kparams['scales'], block_b=block_b)    # (B,T,C) bf16
        return network_tail(h, kparams['net_w'], kparams['net_b'],
                            kparams['out_w'], kparams['out_b'],
                            block_b=block_b)                        # (B,T,1) f32
    return linear_rowsum(x, kparams['out_w'], kparams['out_b'],
                         block_b=block_b)                           # (B,T,1) f32


# ----------------------------------------------------------------------------
# Pure-JAX reference for verification
# ----------------------------------------------------------------------------
def _ref_conv1d(x_btc, w_oik, b, relu):
    K = w_oik.shape[-1]
    P = (K - 1) // 2
    x_ncl = jnp.transpose(x_btc, (0, 2, 1))
    y = jax.lax.conv_general_dilated(
        x_ncl, w_oik, window_strides=(1,), padding=[(P, P)],
        dimension_numbers=('NCH', 'OIH', 'NCH'),
        precision=jax.lax.Precision.HIGHEST)
    y = y + b[None, :, None]
    if relu:
        y = jnp.maximum(y, 0.0)
    return jnp.transpose(y, (0, 2, 1))


def classifier_forward_ref(params, x):
    if params['mode'] == 'readout':
        L = x.shape[0]
        layers = [_ref_conv1d(x[i], params['layerwise'][i]['w'],
                              params['layerwise'][i]['b'], True) for i in range(L)]
        h = sum(params['weight'][i] * layers[i] for i in range(L))
        for layer in params['network']:
            h = _ref_conv1d(h, layer['w'], layer['b'], True)
        x = h
    return (jnp.einsum('btc,oc->bto', x, params['out']['w'],
                       precision=jax.lax.Precision.HIGHEST)
            + params['out']['b'])


if __name__ == "__main__":
    key = jax.random.PRNGKey(0)
    kp, kx, kpf, kxf = jax.random.split(key, 4)

    # --- readout mode (small shapes: n_layers=4, B=2, T=16, input_size=32) ---
    n_layers, B, T, C = 4, 2, 16, 32
    params_ro = init_params(kp, mode='readout', n_layers=n_layers, input_size=C)
    kparams_ro = prepare_params(params_ro)          # one-time weight prep
    x_ro = jax.random.normal(kx, (n_layers, B, T, C), jnp.float32)
    ref_ro = np.asarray(classifier_forward_ref(params_ro, x_ro))

    out_ro = jax.block_until_ready(classifier_forward(kparams_ro, x_ro))
    assert out_ro.shape == (B, T, 1)
    np.testing.assert_allclose(np.asarray(out_ro), ref_ro, rtol=3e-2, atol=3e-2)

    # Exercise the multi-step parallel grid + lane-sparse output fallback path.
    out_ro_b1 = jax.block_until_ready(
        classifier_forward(kparams_ro, x_ro, block_b=1))
    np.testing.assert_allclose(np.asarray(out_ro_b1), ref_ro, rtol=3e-2, atol=3e-2)

    # --- finetune mode: just the Linear(768, 1) head ---
    params_ft = init_params(kpf, mode='finetune')
    kparams_ft = prepare_params(params_ft)
    x_ft = jax.random.normal(kxf, (B, T, 768), jnp.float32)
    ref_ft = np.asarray(classifier_forward_ref(params_ft, x_ft))

    out_ft = jax.block_until_ready(classifier_forward(kparams_ft, x_ft))
    assert out_ft.shape == (B, T, 1)
    np.testing.assert_allclose(np.asarray(out_ft), ref_ft, rtol=1e-3, atol=1e-3)

    # Multi-tile (lane-sparse fallback) path for the finetune head.
    out_ft_b1 = jax.block_until_ready(
        classifier_forward(kparams_ft, x_ft, block_b=1))
    np.testing.assert_allclose(np.asarray(out_ft_b1), ref_ft, rtol=1e-3, atol=1e-3)

    print("KERNEL_OK")
</pallas_src>

<mosaic_0001>
module attributes {stable_mosaic.version = 11 : i64} {
  func.func @readout_combine_kernel(%arg0: i32, %arg1: i32, %arg2: memref<1x2x16x32xf32, #tpu.memory_space<vmem>>, %arg3: memref<1x9x32x32xbf16, #tpu.memory_space<vmem>>, %arg4: memref<1x1x32xf32, #tpu.memory_space<vmem>>, %arg5: memref<4xf32, #tpu.memory_space<smem>>, %arg6: memref<2x16x32xbf16, #tpu.memory_space<vmem>>, %arg7: memref<2x24x32xbf16, #tpu.memory_space<vmem>>, %arg8: memref<2x16x32xf32, #tpu.memory_space<vmem>>) attributes {dimension_semantics = [#tpu.dimension_semantics<parallel>, #tpu.dimension_semantics<arbitrary>], iteration_bounds = array<i64: 1, 4>, scalar_prefetch = 0 : i64, scratch_operands = 2 : i64, tpu.core_type = #tpu.core_type<tc>, window_params = [{transform_indices = @transform_0, window_bounds = array<i64: 1, 2, 16, 32>}, {transform_indices = @transform_1, window_bounds = array<i64: 1, 9, 32, 32>}, {transform_indices = @transform_2, window_bounds = array<i64: 1, 1, 32>}, {transform_indices = @transform_3, window_bounds = array<i64: 4>}, {transform_indices = @transform_4, window_bounds = array<i64: 2, 16, 32>}]} {
    %c0_i32 = arith.constant 0 : i32
    %0 = arith.cmpi eq, %arg1, %c0_i32 : i32
    %1 = arith.extui %0 : i1 to i32
    %c0_i32_0 = arith.constant 0 : i32
    %2 = arith.cmpi ne, %1, %c0_i32_0 : i32
    scf.if %2 {
      %cst_88 = arith.constant 0.000000e+00 : f32
      %83 = vector.broadcast %cst_88 : f32 to vector<2x16x32xf32>
      %c0_89 = arith.constant 0 : index
      %c0_90 = arith.constant 0 : index
      %c0_91 = arith.constant 0 : index
      %84 = vector.load %arg8[%c0_89, %c0_90, %c0_91] : memref<2x16x32xf32, #tpu.memory_space<vmem>>, vector<2x16x32xf32>
      tpu.vector_store %arg8[%c0_89, %c0_90, %c0_91], %83 {strides = array<i32>} : memref<2x16x32xf32, #tpu.memory_space<vmem>>, vector<2x16x32xf32>,
    } else {
    }
    %c0 = arith.constant 0 : index
    %c0_1 = arith.constant 0 : index
    %c0_2 = arith.constant 0 : index
    %c0_3 = arith.constant 0 : index
    %3 = vector.load %arg2[%c0, %c0_1, %c0_2, %c0_3] : memref<1x2x16x32xf32, #tpu.memory_space<vmem>>, vector<1x2x16x32xf32>
    %4 = vector.shape_cast %3 : vector<1x2x16x32xf32> to vector<2x16x32xf32>
    %cst = arith.constant 0.000000e+00 : bf16
    %5 = vector.broadcast %cst : bf16 to vector<2x4x32xbf16>
    %c0_4 = arith.constant 0 : index
    %c0_5 = arith.constant 0 : index
    %c0_6 = arith.constant 0 : index
    %6 = vector.load %arg7[%c0_4, %c0_5, %c0_6] : memref<2x24x32xbf16, #tpu.memory_space<vmem>>, vector<2x4x32xbf16>
    tpu.vector_store %arg7[%c0_4, %c0_5, %c0_6], %5 {strides = array<i32>} : memref<2x24x32xbf16, #tpu.memory_space<vmem>>, vector<2x4x32xbf16>,
    %c0_7 = arith.constant 0 : index
    %c20 = arith.constant 20 : index
    %c0_8 = arith.constant 0 : index
    %7 = vector.load %arg7[%c0_7, %c20, %c0_8] : memref<2x24x32xbf16, #tpu.memory_space<vmem>>, vector<2x4x32xbf16>
    tpu.vector_store %arg7[%c0_7, %c20, %c0_8], %5 {strides = array<i32>} : memref<2x24x32xbf16, #tpu.memory_space<vmem>>, vector<2x4x32xbf16>,
    %8 = arith.truncf %4 : vector<2x16x32xf32> to vector<2x16x32xbf16>
    %c0_9 = arith.constant 0 : index
    %c4 = arith.constant 4 : index
    %c0_10 = arith.constant 0 : index
    %9 = vector.load %arg7[%c0_9, %c4, %c0_10] : memref<2x24x32xbf16, #tpu.memory_space<vmem>>, vector<2x16x32xbf16>
    tpu.vector_store %arg7[%c0_9, %c4, %c0_10], %8 {strides = array<i32>} : memref<2x24x32xbf16, #tpu.memory_space<vmem>>, vector<2x16x32xbf16>,
    %cst_11 = arith.constant 0.000000e+00 : f32
    %10 = vector.broadcast %cst_11 : f32 to vector<32x32xf32>
    %c0_12 = arith.constant 0 : index
    %c0_13 = arith.constant 0 : index
    %c0_14 = arith.constant 0 : index
    %11 = vector.load %arg7[%c0_12, %c0_13, %c0_14] : memref<2x24x32xbf16, #tpu.memory_space<vmem>>, vector<2x16x32xbf16>
    %12 = vector.shape_cast %11 : vector<2x16x32xbf16> to vector<32x32xbf16>
    %c0_15 = arith.constant 0 : index
    %c0_16 = arith.constant 0 : index
    %c0_17 = arith.constant 0 : index
    %c0_18 = arith.constant 0 : index
    %13 = vector.load %arg3[%c0_15, %c0_16, %c0_17, %c0_18] : memref<1x9x32x32xbf16, #tpu.memory_space<vmem>>, vector<1x1x32x32xbf16>
    %14 = vector.shape_cast %13 : vector<1x1x32x32xbf16> to vector<32x32xbf16>
    %cst_19 = arith.constant dense<0.000000e+00> : vector<32x32xf32>
    %15 = tpu.matmul %12, %14, %cst_19 {dimension_numbers = #tpu.dot_dimension_numbers<[1], [0], [0], [1], [0, 0, 1, 1], [], []>} : vector<32x32xbf16>, vector<32x32xbf16>, vector<32x32xf32> -> vector<32x32xf32>
    %16 = arith.addf %10, %15 : vector<32x32xf32>
    %c0_20 = arith.constant 0 : index
    %c1 = arith.constant 1 : index
    %c0_21 = arith.constant 0 : index
    %17 = vector.load %arg7[%c0_20, %c1, %c0_21] : memref<2x24x32xbf16, #tpu.memory_space<vmem>>, vector<2x16x32xbf16>
    %18 = vector.shape_cast %17 : vector<2x16x32xbf16> to vector<32x32xbf16>
    %c0_22 = arith.constant 0 : index
    %c1_23 = arith.constant 1 : index
    %c0_24 = arith.constant 0 : index
    %c0_25 = arith.constant 0 : index
    %19 = vector.load %arg3[%c0_22, %c1_23, %c0_24, %c0_25] : memref<1x9x32x32xbf16, #tpu.memory_space<vmem>>, vector<1x1x32x32xbf16>
    %20 = vector.shape_cast %19 : vector<1x1x32x32xbf16> to vector<32x32xbf16>
    %cst_26 = arith.constant dense<0.000000e+00> : vector<32x32xf32>
    %21 = tpu.matmul %18, %20, %cst_26 {dimension_numbers = #tpu.dot_dimension_numbers<[1], [0], [0], [1], [0, 0, 1, 1], [], []>} : vector<32x32xbf16>, vector<32x32xbf16>, vector<32x32xf32> -> vector<32x32xf32>
    %22 = arith.addf %16, %21 : vector<32x32xf32>
    %c0_27 = arith.constant 0 : index
    %c2 = arith.constant 2 : index
    %c0_28 = arith.constant 0 : index
    %23 = vector.load %arg7[%c0_27, %c2, %c0_28] : memref<2x24x32xbf16, #tpu.memory_space<vmem>>, vector<2x16x32xbf16>
    %24 = vector.shape_cast %23 : vector<2x16x32xbf16> to vector<32x32xbf16>
    %c0_29 = arith.constant 0 : index
    %c2_30 = arith.constant 2 : index
    %c0_31 = arith.constant 0 : index
    %c0_32 = arith.constant 0 : index
    %25 = vector.load %arg3[%c0_29, %c2_30, %c0_31, %c0_32] : memref<1x9x32x32xbf16, #tpu.memory_space<vmem>>, vector<1x1x32x32xbf16>
    %26 = vector.shape_cast %25 : vector<1x1x32x32xbf16> to vector<32x32xbf16>
    %cst_33 = arith.constant dense<0.000000e+00> : vector<32x32xf32>
    %27 = tpu.matmul %24, %26, %cst_33 {dimension_numbers = #tpu.dot_dimension_numbers<[1], [0], [0], [1], [0, 0, 1, 1], [], []>} : vector<32x32xbf16>, vector<32x32xbf16>, vector<32x32xf32> -> vector<32x32xf32>
    %28 = arith.addf %22, %27 : vector<32x32xf32>
    %c0_34 = arith.constant 0 : index
    %c3 = arith.constant 3 : index
    %c0_35 = arith.constant 0 : index
    %29 = vector.load %arg7[%c0_34, %c3, %c0_35] : memref<2x24x32xbf16, #tpu.memory_space<vmem>>, vector<2x16x32xbf16>
    %30 = vector.shape_cast %29 : vector<2x16x32xbf16> to vector<32x32xbf16>
    %c0_36 = arith.constant 0 : index
    %c3_37 = arith.constant 3 : index
    %c0_38 = arith.constant 0 : index
    %c0_39 = arith.constant 0 : index
    %31 = vector.load %arg3[%c0_36, %c3_37, %c0_38, %c0_39] : memref<1x9x32x32xbf16, #tpu.memory_space<vmem>>, vector<1x1x32x32xbf16>
    %32 = vector.shape_cast %31 : vector<1x1x32x32xbf16> to vector<32x32xbf16>
    %cst_40 = arith.constant dense<0.000000e+00> : vector<32x32xf32>
    %33 = tpu.matmul %30, %32, %cst_40 {dimension_numbers = #tpu.dot_dimension_numbers<[1], [0], [0], [1], [0, 0, 1, 1], [], []>} : vector<32x32xbf16>, vector<32x32xbf16>, vector<32x32xf32> -> vector<32x32xf32>
    %34 = arith.addf %28, %33 : vector<32x32xf32>
    %c0_41 = arith.constant 0 : index
    %c4_42 = arith.constant 4 : index
    %c0_43 = arith.constant 0 : index
    %35 = vector.load %arg7[%c0_41, %c4_42, %c0_43] : memref<2x24x32xbf16, #tpu.memory_space<vmem>>, vector<2x16x32xbf16>
    %36 = vector.shape_cast %35 : vector<2x16x32xbf16> to vector<32x32xbf16>
    %c0_44 = arith.constant 0 : index
    %c4_45 = arith.constant 4 : index
    %c0_46 = arith.constant 0 : index
    %c0_47 = arith.constant 0 : index
    %37 = vector.load %arg3[%c0_44, %c4_45, %c0_46, %c0_47] : memref<1x9x32x32xbf16, #tpu.memory_space<vmem>>, vector<1x1x32x32xbf16>
    %38 = vector.shape_cast %37 : vector<1x1x32x32xbf16> to vector<32x32xbf16>
    %cst_48 = arith.constant dense<0.000000e+00> : vector<32x32xf32>
    %39 = tpu.matmul %36, %38, %cst_48 {dimension_numbers = #tpu.dot_dimension_numbers<[1], [0], [0], [1], [0, 0, 1, 1], [], []>} : vector<32x32xbf16>, vector<32x32xbf16>, vector<32x32xf32> -> vector<32x32xf32>
    %40 = arith.addf %34, %39 : vector<32x32xf32>
    %c0_49 = arith.constant 0 : index
    %c5 = arith.constant 5 : index
    %c0_50 = arith.constant 0 : index
    %41 = vector.load %arg7[%c0_49, %c5, %c0_50] : memref<2x24x32xbf16, #tpu.memory_space<vmem>>, vector<2x16x32xbf16>
    %42 = vector.shape_cast %41 : vector<2x16x32xbf16> to vector<32x32xbf16>
    %c0_51 = arith.constant 0 : index
    %c5_52 = arith.constant 5 : index
    %c0_53 = arith.constant 0 : index
    %c0_54 = arith.constant 0 : index
    %43 = vector.load %arg3[%c0_51, %c5_52, %c0_53, %c0_54] : memref<1x9x32x32xbf16, #tpu.memory_space<vmem>>, vector<1x1x32x32xbf16>
    %44 = vector.shape_cast %43 : vector<1x1x32x32xbf16> to vector<32x32xbf16>
    %cst_55 = arith.constant dense<0.000000e+00> : vector<32x32xf32>
    %45 = tpu.matmul %42, %44, %cst_55 {dimension_numbers = #tpu.dot_dimension_numbers<[1], [0], [0], [1], [0, 0, 1, 1], [], []>} : vector<32x32xbf16>, vector<32x32xbf16>, vector<32x32xf32> -> vector<32x32xf32>
    %46 = arith.addf %40, %45 : vector<32x32xf32>
    %c0_56 = arith.constant 0 : index
    %c6 = arith.constant 6 : index
    %c0_57 = arith.constant 0 : index
    %47 = vector.load %arg7[%c0_56, %c6, %c0_57] : memref<2x24x32xbf16, #tpu.memory_space<vmem>>, vector<2x16x32xbf16>
    %48 = vector.shape_cast %47 : vector<2x16x32xbf16> to vector<32x32xbf16>
    %c0_58 = arith.constant 0 : index
    %c6_59 = arith.constant 6 : index
    %c0_60 = arith.constant 0 : index
    %c0_61 = arith.constant 0 : index
    %49 = vector.load %arg3[%c0_58, %c6_59, %c0_60, %c0_61] : memref<1x9x32x32xbf16, #tpu.memory_space<vmem>>, vector<1x1x32x32xbf16>
    %50 = vector.shape_cast %49 : vector<1x1x32x32xbf16> to vector<32x32xbf16>
    %cst_62 = arith.constant dense<0.000000e+00> : vector<32x32xf32>
    %51 = tpu.matmul %48, %50, %cst_62 {dimension_numbers = #tpu.dot_dimension_numbers<[1], [0], [0], [1], [0, 0, 1, 1], [], []>} : vector<32x32xbf16>, vector<32x32xbf16>, vector<32x32xf32> -> vector<32x32xf32>
    %52 = arith.addf %46, %51 : vector<32x32xf32>
    %c0_63 = arith.constant 0 : index
    %c7 = arith.constant 7 : index
    %c0_64 = arith.constant 0 : index
    %53 = vector.load %arg7[%c0_63, %c7, %c0_64] : memref<2x24x32xbf16, #tpu.memory_space<vmem>>, vector<2x16x32xbf16>
    %54 = vector.shape_cast %53 : vector<2x16x32xbf16> to vector<32x32xbf16>
    %c0_65 = arith.constant 0 : index
    %c7_66 = arith.constant 7 : index
    %c0_67 = arith.constant 0 : index
    %c0_68 = arith.constant 0 : index
    %55 = vector.load %arg3[%c0_65, %c7_66, %c0_67, %c0_68] : memref<1x9x32x32xbf16, #tpu.memory_space<vmem>>, vector<1x1x32x32xbf16>
    %56 = vector.shape_cast %55 : vector<1x1x32x32xbf16> to vector<32x32xbf16>
    %cst_69 = arith.constant dense<0.000000e+00> : vector<32x32xf32>
    %57 = tpu.matmul %54, %56, %cst_69 {dimension_numbers = #tpu.dot_dimension_numbers<[1], [0], [0], [1], [0, 0, 1, 1], [], []>} : vector<32x32xbf16>, vector<32x32xbf16>, vector<32x32xf32> -> vector<32x32xf32>
    %58 = arith.addf %52, %57 : vector<32x32xf32>
    %c0_70 = arith.constant 0 : index
    %c8 = arith.constant 8 : index
    %c0_71 = arith.constant 0 : index
    %59 = vector.load %arg7[%c0_70, %c8, %c0_71] : memref<2x24x32xbf16, #tpu.memory_space<vmem>>, vector<2x16x32xbf16>
    %60 = vector.shape_cast %59 : vector<2x16x32xbf16> to vector<32x32xbf16>
    %c0_72 = arith.constant 0 : index
    %c8_73 = arith.constant 8 : index
    %c0_74 = arith.constant 0 : index
    %c0_75 = arith.constant 0 : index
    %61 = vector.load %arg3[%c0_72, %c8_73, %c0_74, %c0_75] : memref<1x9x32x32xbf16, #tpu.memory_space<vmem>>, vector<1x1x32x32xbf16>
    %62 = vector.shape_cast %61 : vector<1x1x32x32xbf16> to vector<32x32xbf16>
    %cst_76 = arith.constant dense<0.000000e+00> : vector<32x32xf32>
    %63 = tpu.matmul %60, %62, %cst_76 {dimension_numbers = #tpu.dot_dimension_numbers<[1], [0], [0], [1], [0, 0, 1, 1], [], []>} : vector<32x32xbf16>, vector<32x32xbf16>, vector<32x32xf32> -> vector<32x32xf32>
    %64 = arith.addf %58, %63 : vector<32x32xf32>
    %65 = vector.shape_cast %64 : vector<32x32xf32> to vector<2x16x32xf32>
    %c0_77 = arith.constant 0 : index
    %c0_78 = arith.constant 0 : index
    %c0_79 = arith.constant 0 : index
    %66 = vector.load %arg4[%c0_77, %c0_78, %c0_79] : memref<1x1x32xf32, #tpu.memory_space<vmem>>, vector<1x1x32xf32>
    %67 = vector.shape_cast %66 : vector<1x1x32xf32> to vector<1x32xf32>
    %68 = vector.shape_cast %67 : vector<1x32xf32> to vector<1x1x32xf32>
    %69 = vector.broadcast %68 : vector<1x1x32xf32> to vector<2x16x32xf32>
    %70 = arith.addf %65, %69 : vector<2x16x32xf32>
    %cst_80 = arith.constant 0.000000e+00 : f32
    %71 = vector.broadcast %cst_80 : f32 to vector<2x16x32xf32>
    %72 = arith.maximumf %70, %71 : vector<2x16x32xf32>
    %c0_81 = arith.constant 0 : index
    %c0_82 = arith.constant 0 : index
    %c0_83 = arith.constant 0 : index
    %73 = vector.load %arg8[%c0_81, %c0_82, %c0_83] : memref<2x16x32xf32, #tpu.memory_space<vmem>>, vector<2x16x32xf32>
    %74 = arith.index_cast %arg1 : i32 to index
    %75 = memref.load %arg5[%74] : memref<4xf32, #tpu.memory_space<smem>>
    %76 = vector.broadcast %75 : f32 to vector<2x16x32xf32>
    %77 = arith.mulf %76, %72 : vector<2x16x32xf32>
    %78 = arith.addf %73, %77 : vector<2x16x32xf32>
    %c0_84 = arith.constant 0 : index
    %c0_85 = arith.constant 0 : index
    %c0_86 = arith.constant 0 : index
    %79 = vector.load %arg8[%c0_84, %c0_85, %c0_86] : memref<2x16x32xf32, #tpu.memory_space<vmem>>, vector<2x16x32xf32>
    tpu.vector_store %arg8[%c0_84, %c0_85, %c0_86], %78 {strides = array<i32>} : memref<2x16x32xf32, #tpu.memory_space<vmem>>, vector<2x16x32xf32>,
    %c3_i32 = arith.constant 3 : i32
    %80 = arith.cmpi eq, %arg1, %c3_i32 : i32
    %81 = arith.extui %80 : i1 to i32
    %c0_i32_87 = arith.constant 0 : i32
    %82 = arith.cmpi ne, %81, %c0_i32_87 : i32
    scf.if %82 {
      %c0_88 = arith.constant 0 : index
      %c0_89 = arith.constant 0 : index
      %c0_90 = arith.constant 0 : index
      %83 = vector.load %arg8[%c0_88, %c0_89, %c0_90] : memref<2x16x32xf32, #tpu.memory_space<vmem>>, vector<2x16x32xf32>
      %84 = arith.truncf %83 : vector<2x16x32xf32> to vector<2x16x32xbf16>
      %c0_91 = arith.constant 0 : index
      %c0_92 = arith.constant 0 : index
      %c0_93 = arith.constant 0 : index
      %85 = vector.load %arg6[%c0_91, %c0_92, %c0_93] : memref<2x16x32xbf16, #tpu.memory_space<vmem>>, vector<2x16x32xbf16>
      tpu.vector_store %arg6[%c0_91, %c0_92, %c0_93], %84 {strides = array<i32>} : memref<2x16x32xbf16, #tpu.memory_space<vmem>>, vector<2x16x32xbf16>,
    } else {
    }
    return
  }
  func.func @transform_0(%arg0: i32, %arg1: i32) -> (i32, i32, i32, i32) {
    %c0_i32 = arith.constant 0 : i32
    %c0_i32_0 = arith.constant 0 : i32
    %c0_i32_1 = arith.constant 0 : i32
    return %arg1, %arg0, %c0_i32, %c0_i32_0 : i32, i32, i32, i32
  }
  func.func @transform_1(%arg0: i32, %arg1: i32) -> (i32, i32, i32, i32) {
    %c0_i32 = arith.constant 0 : i32
    %c0_i32_0 = arith.constant 0 : i32
    %c0_i32_1 = arith.constant 0 : i32
    %c0_i32_2 = arith.constant 0 : i32
    return %arg1, %c0_i32, %c0_i32_0, %c0_i32_1 : i32, i32, i32, i32
  }
  func.func @transform_2(%arg0: i32, %arg1: i32) -> (i32, i32, i32) {
    %c0_i32 = arith.constant 0 : i32
    %c0_i32_0 = arith.constant 0 : i32
    %c0_i32_1 = arith.constant 0 : i32
    return %arg1, %c0_i32, %c0_i32_0 : i32, i32, i32
  }
  func.func @transform_3(%arg0: i32, %arg1: i32) -> i32 {
    %c0_i32 = arith.constant 0 : i32
    %c0_i32_0 = arith.constant 0 : i32
    return %c0_i32 : i32
  }
  func.func @transform_4(%arg0: i32, %arg1: i32) -> (i32, i32, i32) {
    %c0_i32 = arith.constant 0 : i32
    %c0_i32_0 = arith.constant 0 : i32
    %c0_i32_1 = arith.constant 0 : i32
    return %arg0, %c0_i32, %c0_i32_0 : i32, i32, i32
  }
}

</mosaic_0001>

<llo_original>
// kernel: tpu_custom_call.1
$region0: #{tpu_custom_call.1}
  #allocation0 [shape = 'u32[]', space=smem, size = 0x4, offset = 0x4, fixed_abs, tag = 'smem constant byte address 0x4 - core index']
  #allocation1 [shape = 'u32[72,128]{1,0:T(1,128)}', space=vmem, size = 0x9000, scoped, tag = 'internal scratch']
  #allocation2 [shape = 'bf16[2,24,32]{2,1,0:T(8,128)(2,1)}', space=vmem, size = 0x3000, scoped, tag = 'scratch operand']
  #allocation3 [shape = 'f32[2,16,32]{2,1,0:T(8,128)}', space=vmem, size = 0x4000, scoped, tag = 'scratch operand']
  %s0 = inlined_call_operand.hbm [shape: f32[4,2,16,32], index: 0, kind: input, shape index: {}]
  %s1 = inlined_call_operand.hbm [shape: bf16[4,9,32,32], index: 1, kind: input, shape index: {}]
  %s2 = inlined_call_operand.hbm [shape: f32[4,1,32], index: 2, kind: input, shape index: {}]
  %s3 = inlined_call_operand.vmem [shape: f32[4], index: 3, kind: input, shape index: {}]
  %s4 = inlined_call_operand.hbm [shape: bf16[2,16,32], index: 4, kind: output, shape index: {}]
  %s5 = sld [smem:[#allocation0]]
  $region73: #{tpu_custom_call.1} parent=0
    _
  %s7 = ssub.s32 1, %s5
  %s8 = scalar_select 0, %s7, %s5
  $region1: #{tpu_custom_call.1} parent=0
    #allocation4 [shape = 'u8[32768]{0}', space=vmem, size = 0x8000, scoped, tag = 'input window, operand 0']
    #allocation5 [shape = 's32[2]{0}', space=sflag, size = 0x8, scoped, tag = 'scoped memory for tpu_custom_call.1']
    #allocation6 [shape = 's32[2]{0}', space=sflag, size = 0x8, scoped, tag = 'scoped memory for tpu_custom_call.1']
    #allocation7 [shape = 's32[2]{0}', space=sflag, size = 0x8, scoped, tag = 'scoped memory for tpu_custom_call.1']
    #allocation8 [shape = 'u8[147456]{0}', space=vmem, size = 0x24000, scoped, tag = 'input window, operand 1']
    #allocation9 [shape = 's32[2]{0}', space=sflag, size = 0x8, scoped, tag = 'scoped memory for tpu_custom_call.1']
    #allocation10 [shape = 'u8[1024]{0}', space=vmem, size = 0x400, scoped, tag = 'input window, operand 2']
    #allocation11 [shape = 'u8[512]{0}', space=smem, size = 0x200, scoped, tag = 'input window, operand 3, single buffered']
    #allocation12 [shape = 'u8[8192]{0}', space=vmem, size = 0x2000, scoped, tag = 'output window, operand 0, single buffered']
    %9 = vsyncpa [#allocation5], 0
    %s10 = scalar_lea.sflag [#allocation5], 1
    %11 = vsyncpa %s10, 0
    %12 = vsyncpa [#allocation9], 0
    %s13 = scalar_lea.sflag [#allocation9], 1
    %14 = vsyncpa %s13, 0
    %15 = vsyncpa [#allocation7], 0
    %16 = vsyncpa [#allocation6], 0
    loop: start=0, step=1, limit=6
    $region2: #{tpu_custom_call.1} parent=1 // loop_pre_header
      _
    $region3: #{tpu_custom_call.1} parent=1 // loop_header
      %s18 = sphi 0, %s22
      %p19 = scmp.ge.s32.totalorder %s18, 6
      %s25 = sphi 0, %s37
      %s26 = sphi 0, %s33
      %s27 = sphi 0, %s25
      %s28 = sphi 0, %s26
      %s29 = sphi 0, %s27
      %s30 = sphi 0, %s28
      %s42 = sphi 0, %s44
      %s45 = sphi 0, %s42
      %s46 = sphi 0, %s45
      %s62 = sphi 0, %s46
      %s68 = sphi 0, %s70
      %s71 = sphi 0, %s68
      %s72 = sphi 0, %s71
      %s88 = sphi 0, %s72
      %s94 = sphi 0, %s96
      %s97 = sphi 0, %s94
      %s98 = sphi 0, %s97
      %s114 = sphi 0, %s98
      %s118 = sphi 0, %s118
      %s120 = sphi 0, %s118
      %s121 = sphi 0, %s120
      %s135 = sphi 0, %s121
      %s141 = sphi 0, %s143
      %s144 = sphi 0, %s141
      %s145 = sphi 0, %s144
      %s161 = sphi 0, %s145
    $region4: #{tpu_custom_call.1} parent=1 // loop_header_branch
      %21 = sbr.rel (%p19) target = $region8
    $region5: #{tpu_custom_call.1} parent=1 // loop_body
      %s23 = ssub.s32 %s18, 1
      %s24 = ssub.s32 %s18, 2
      %s31 = sadd.s32 1, %s26
      %p32 = scmp.ge.s32.totalorder %s31, 4
      %s33 = scalar_select %p32, 0, %s31
      %s34 = sadd.s32 1, %s25
      %s35 = scalar_select %p32, %s34, %s25
      %p36 = scmp.ge.s32.totalorder %s35, 1
      %s37 = scalar_select %p36, 0, %s35
      %s38 = ssub.s32 %s26, %s33
      %s39 = ssub.s32 %s25, %s37
      %s40 = sor.u32 %s38, %s39
      %p41 = scmp.eq.s32.totalorder %s40, 0
      %s43 = sadd.s32 %s42, 1
      %s44 = scalar_select %p41, %s42, %s43
      %p47 = pneg %p41
      %p48 = scmp.eq.s32.totalorder %s18, 3
      %p49 = por %p47, %p48
      %p50 = scmp.ne.s32.totalorder %s42, %s45
      %p51 = scmp.eq.s32.totalorder %s18, 0
      %p52 = por %p50, %p51
      %p53 = scmp.ne.s32.totalorder %s42, %s45
      %p54 = scmp.eq.s32.totalorder %s23, 3
      %p55 = por %p53, %p54
      %p56 = scmp.ne.s32.totalorder %s45, %s46
      %p57 = scmp.eq.s32.totalorder %s23, 0
      %p58 = por %p56, %p57
      %p59 = scmp.ne.s32.totalorder %s45, %s46
      %p60 = scmp.eq.s32.totalorder %s24, 3
      %p61 = por %p59, %p60
      %p63 = scmp.ne.s32.totalorder %s46, %s62
      %p64 = scmp.eq.s32.totalorder %s24, 0
      %p65 = por %p63, %p64
      %s66 = ssub.s32 %s26, %s33
      %p67 = scmp.eq.s32.totalorder %s66, 0
      %s69 = sadd.s32 %s68, 1
      %s70 = scalar_select %p67, %s68, %s69
      %p73 = pneg %p67
      %p74 = scmp.eq.s32.totalorder %s18, 3
      %p75 = por %p73, %p74
      %p76 = scmp.ne.s32.totalorder %s68, %s71
      %p77 = scmp.eq.s32.totalorder %s18, 0
      %p78 = por %p76, %p77
      %p79 = scmp.ne.s32.totalorder %s68, %s71
      %p80 = scmp.eq.s32.totalorder %s23, 3
      %p81 = por %p79, %p80
      %p82 = scmp.ne.s32.totalorder %s71, %s72
      %p83 = scmp.eq.s32.totalorder %s23, 0
      %p84 = por %p82, %p83
      %p85 = scmp.ne.s32.totalorder %s71, %s72
      %p86 = scmp.eq.s32.totalorder %s24, 3
      %p87 = por %p85, %p86
      %p89 = scmp.ne.s32.totalorder %s72, %s88
      %p90 = scmp.eq.s32.totalorder %s24, 0
      %p91 = por %p89, %p90
      %s92 = ssub.s32 %s26, %s33
      %p93 = scmp.eq.s32.totalorder %s92, 0
      %s95 = sadd.s32 %s94, 1
      %s96 = scalar_select %p93, %s94, %s95
      %p99 = pneg %p93
      %p100 = scmp.eq.s32.totalorder %s18, 3
      %p101 = por %p99, %p100
      %p102 = scmp.ne.s32.totalorder %s94, %s97
      %p103 = scmp.eq.s32.totalorder %s18, 0
      %p104 = por %p102, %p103
      %p105 = scmp.ne.s32.totalorder %s94, %s97
      %p106 = scmp.eq.s32.totalorder %s23, 3
      %p107 = por %p105, %p106
      %p108 = scmp.ne.s32.totalorder %s97, %s98
      %p109 = scmp.eq.s32.totalorder %s23, 0
      %p110 = por %p108, %p109
      %p111 = scmp.ne.s32.totalorder %s97, %s98
      %p112 = scmp.eq.s32.totalorder %s24, 3
      %p113 = por %p111, %p112
      %p115 = scmp.ne.s32.totalorder %s98, %s114
      %p116 = scmp.eq.s32.totalorder %s24, 0
      %p117 = por %p115, %p116
      %s119 = sadd.s32 %s118, 1
      %p122 = scmp.eq.s32.totalorder %s18, 3
      %p123 = scmp.ne.s32.totalorder %s118, %s120
      %p124 = scmp.eq.s32.totalorder %s18, 0
      %p125 = por %p123, %p124
      %p126 = scmp.ne.s32.totalorder %s118, %s120
      %p127 = scmp.eq.s32.totalorder %s23, 3
      %p128 = por %p126, %p127
      %p129 = scmp.ne.s32.totalorder %s120, %s121
      %p130 = scmp.eq.s32.totalorder %s23, 0
      %p131 = por %p129, %p130
      %p132 = scmp.ne.s32.totalorder %s120, %s121
      %p133 = scmp.eq.s32.totalorder %s24, 3
      %p134 = por %p132, %p133
      %p136 = scmp.ne.s32.totalorder %s121, %s135
      %p137 = scmp.eq.s32.totalorder %s24, 0
      %p138 = por %p136, %p137
      %s139 = ssub.s32 %s25, %s37
      %p140 = scmp.eq.s32.totalorder %s139, 0
      %s142 = sadd.s32 %s141, 1
      %s143 = scalar_select %p140, %s141, %s142
      %p146 = pneg %p140
      %p147 = scmp.eq.s32.totalorder %s18, 3
      %p148 = por %p146, %p147
      %p149 = scmp.ne.s32.totalorder %s141, %s144
      %p150 = scmp.eq.s32.totalorder %s18, 0
      %p151 = por %p149, %p150
      %p152 = scmp.ne.s32.totalorder %s141, %s144
      %p153 = scmp.eq.s32.totalorder %s23, 3
      %p154 = por %p152, %p153
      %p155 = scmp.ne.s32.totalorder %s144, %s145
      %p156 = scmp.eq.s32.totalorder %s23, 0
      %p157 = por %p155, %p156
      %p158 = scmp.ne.s32.totalorder %s144, %s145
      %p159 = scmp.eq.s32.totalorder %s24, 3
      %p160 = por %p158, %p159
      %p162 = scmp.ne.s32.totalorder %s145, %s161
      %p163 = scmp.eq.s32.totalorder %s24, 0
      %p164 = por %p162, %p163
      %p165 = scmp.le.s32.totalorder 1, %s18
      %p166 = scmp.lt.s32.totalorder %s18, 5
      %p167 = pnand %p165, %p166
      %p168 = pneg %p167
      // Predicated region
      $region9: #{tpu_custom_call.1} parent=5 // pred_check
        _
      $region10: #{tpu_custom_call.1} parent=5 // pred_check_branch
        %170 = sbr.rel (%p167) target = $region12
      $region11: #{tpu_custom_call.1} parent=5 // pred_region
        %s171 = ssub.s32 %s18, 1
        // Predicated region
        $region13: #{tpu_custom_call.1} parent=11 // pred_check
          %p172 = pneg %p131
        $region14: #{tpu_custom_call.1} parent=11 // pred_check_branch
          %174 = sbr.rel (%p172) target = $region16
        $region15: #{tpu_custom_call.1} parent=11 // pred_region
          %176 = vsyncadd [#allocation7], 0
          %s178 = sshll.u32 %s3, 4
          %s179 = int_to_ptr.vmem [resolvable:$true] %s178
          %181 = dma.vmem_to_smem %s179, 16, [#allocation11], [#allocation7]
        $region16: #{tpu_custom_call.1} parent=11 // pred_fallthru
          _
      $region12: #{tpu_custom_call.1} parent=5 // pred_fallthru
        _
      %p182 = scmp.lt.s32.totalorder %s18, 4
      // Predicated region
      $region17: #{tpu_custom_call.1} parent=5 // pred_check
        %p183 = pneg %p182
      $region18: #{tpu_custom_call.1} parent=5 // pred_check_branch
        %185 = sbr.rel (%p183) target = $region20
      $region19: #{tpu_custom_call.1} parent=5 // pred_region
        // Predicated region
        $region21: #{tpu_custom_call.1} parent=19 // pred_check
          %p186 = pneg %p52
        $region22: #{tpu_custom_call.1} parent=19 // pred_check_branch
          %188 = sbr.rel (%p186) target = $region24
        $region23: #{tpu_custom_call.1} parent=19 // pred_region
          %s189 = sand.u32 %s42, 1
          %s190 = scalar_lea.sflag [#allocation5], %s189
          %s191 = sand.u32 %s42, 1
          %s192 = smul.addr %s191, 32
          %s193 = scalar_lea.vmem [#allocation4], %s192
          %s194 = smul.u32 2, %s25
          %196 = vsyncadd %s190, 0
          %s197 = smul.addr %s194, 2
          %s198 = smul.addr %s26, 4
          %s199 = sadd.s32 %s197, %s198
          %s200 = smul.addr %s199, 8
          %s201 = scalar_lea.hbm %s0, %s200
          %s202 = sshll.u32 %s201, 4
          %s203 = int_to_ptr.hbm [resolvable:$true] %s202
          %s204 = sshll.u32 %s193, 4
          %s205 = int_to_ptr.vmem [resolvable:$true] %s204
          %210 = dma.hbm_to_vmem [thread:$0]  %s203, 512, %s205, %s190, 128, 128, 8
        $region24: #{tpu_custom_call.1} parent=19 // pred_fallthru
          _
        // Predicated region
        $region25: #{tpu_custom_call.1} parent=19 // pred_check
          %p211 = pneg %p78
        $region26: #{tpu_custom_call.1} parent=19 // pred_check_branch
          %213 = sbr.rel (%p211) target = $region28
        $region27: #{tpu_custom_call.1} parent=19 // pred_region
          %s214 = sand.u32 %s18, 1
          %s215 = scalar_lea.sflag [#allocation9], %s214
          %s216 = sand.u32 %s68, 1
          %s217 = smul.addr %s216, 144
          %s218 = scalar_lea.vmem [#allocation8], %s217
          %220 = vsyncadd %s215, 0
          %s221 = smul.addr %s26, 36
          %s222 = smul.addr %s221, 4
          %s223 = scalar_lea.hbm %s1, %s222
          %s224 = sshll.u32 %s223, 4
          %s225 = int_to_ptr.hbm [resolvable:$true] %s224
          %s226 = sshll.u32 %s218, 4
          %s227 = int_to_ptr.vmem [resolvable:$true] %s226
          %232 = dma.hbm_to_vmem [thread:$0]  %s225, 2304, %s227, %s215, 64, 64, 4
        $region28: #{tpu_custom_call.1} parent=19 // pred_fallthru
          _
        // Predicated region
        $region29: #{tpu_custom_call.1} parent=19 // pred_check
          %p233 = pneg %p104
        $region30: #{tpu_custom_call.1} parent=19 // pred_check_branch
          %235 = sbr.rel (%p233) target = $region32
        $region31: #{tpu_custom_call.1} parent=19 // pred_region
          %s236 = sand.u32 %s18, 1
          %s237 = scalar_lea.sflag [#allocation9], %s236
          %s238 = sand.u32 %s94, 1
          %s239 = scalar_lea.vmem [#allocation10], %s238
          %241 = vsyncadd %s237, 0
          %s242 = scalar_lea.hbm %s2, %s26
          %s244 = sshll.u32 %s242, 4
          %s245 = int_to_ptr.hbm [resolvable:$true] %s244
          %s246 = sshll.u32 %s239, 4
          %s247 = int_to_ptr.vmem [resolvable:$true] %s246
          %249 = dma.hbm_to_vmem [thread:$0]  %s245, 16, %s247, %s237
        $region32: #{tpu_custom_call.1} parent=19 // pred_fallthru
          _
      $region20: #{tpu_custom_call.1} parent=5 // pred_fallthru
        _
      %p250 = scmp.le.s32.totalorder 1, %s18
      %p251 = scmp.lt.s32.totalorder %s18, 5
      %p252 = pnand %p250, %p251
      %p253 = pneg %p252
      // Predicated region
      $region33: #{tpu_custom_call.1} parent=5 // pred_check
        _
      $region34: #{tpu_custom_call.1} parent=5 // pred_check_branch
        %255 = sbr.rel (%p252) target = $region36
      $region35: #{tpu_custom_call.1} parent=5 // pred_region
        %s256 = ssub.s32 %s18, 1
        %s257 = sand.u32 %s45, 1
        %s258 = scalar_lea.sflag [#allocation5], %s257
        %s259 = sand.u32 %s45, 1
        %s260 = smul.addr %s259, 32
        %s261 = scalar_lea.vmem [#allocation4], %s260
        // Predicated region
        $region37: #{tpu_custom_call.1} parent=35 // pred_check
          %p262 = pneg %p58
        $region38: #{tpu_custom_call.1} parent=35 // pred_check_branch
          %264 = sbr.rel (%p262) target = $region40
        $region39: #{tpu_custom_call.1} parent=35 // pred_region
          %266 = dma.done %s258, 512
        $region40: #{tpu_custom_call.1} parent=35 // pred_fallthru
          _
        %s267 = sand.u32 %s23, 1
        %s268 = scalar_lea.sflag [#allocation9], %s267
        %s269 = sand.u32 %s71, 1
        %s270 = smul.addr %s269, 144
        %s271 = scalar_lea.vmem [#allocation8], %s270
        // Predicated region
        $region41: #{tpu_custom_call.1} parent=35 // pred_check
          %p272 = pneg %p84
        $region42: #{tpu_custom_call.1} parent=35 // pred_check_branch
          %274 = sbr.rel (%p272) target = $region44
        $region43: #{tpu_custom_call.1} parent=35 // pred_region
          %276 = dma.done %s268, 2304
        $region44: #{tpu_custom_call.1} parent=35 // pred_fallthru
          _
        %s277 = sand.u32 %s23, 1
        %s278 = scalar_lea.sflag [#allocation9], %s277
        %s279 = sand.u32 %s97, 1
        %s280 = scalar_lea.vmem [#allocation10], %s279
        // Predicated region
        $region45: #{tpu_custom_call.1} parent=35 // pred_check
          %p281 = pneg %p110
        $region46: #{tpu_custom_call.1} parent=35 // pred_check_branch
          %283 = sbr.rel (%p281) target = $region48
        $region47: #{tpu_custom_call.1} parent=35 // pred_region
          %285 = dma.done %s278, 16
        $region48: #{tpu_custom_call.1} parent=35 // pred_fallthru
          _
        // Predicated region
        $region49: #{tpu_custom_call.1} parent=35 // pred_check
          %p286 = pneg %p131
        $region50: #{tpu_custom_call.1} parent=35 // pred_check_branch
          %288 = sbr.rel (%p286) target = $region52
        $region51: #{tpu_custom_call.1} parent=35 // pred_region
          %290 = dma.done [#allocation7], 16
        $region52: #{tpu_custom_call.1} parent=35 // pred_fallthru
          _
        %291 = sfence
        %s292 = sand.u32 %s45, 1
        %s293 = scalar_lea.sflag [#allocation5], %s292
        %s294 = sand.u32 %s45, 1
        %s295 = smul.addr %s294, 32
        %s296 = scalar_lea.vmem [#allocation4], %s295
        %p297 = pneg %p58
        %p298 = pneg %p55
        %s299 = sand.u32 %s23, 1
        %s300 = scalar_lea.sflag [#allocation9], %s299
        %s301 = sand.u32 %s71, 1
        %s302 = smul.addr %s301, 144
        %s303 = scalar_lea.vmem [#allocation8], %s302
        %p304 = pneg %p84
        %p305 = pneg %p81
        %s306 = sand.u32 %s23, 1
        %s307 = scalar_lea.sflag [#allocation9], %s306
        %s308 = sand.u32 %s97, 1
        %s309 = scalar_lea.vmem [#allocation10], %s308
        %p310 = pneg %p110
        %p311 = pneg %p107
        %p312 = pneg %p131
        %p313 = pneg %p128
        %p314 = pneg %p157
        %p315 = pneg %p154
        %s316 = smul.u32 2, %s27
        %s317 = smul.u32 2, %s27
        %p319 = scmp.eq.s32.totalorder %s28, 0
        // Predicated region
        $region53: #{tpu_custom_call.1} parent=35 // pred_check
          %p320 = pneg %p319
        $region54: #{tpu_custom_call.1} parent=35 // pred_check_branch
          %322 = sbr.rel (%p320) target = $region56
        $region55: #{tpu_custom_call.1} parent=35 // pred_region
          %vm323 = vcmask 261120
          %324 = vst.msk [vmem:[#allocation3] sm:$0xff] %vm323, 0.0
          %325 = vst.msk [vmem:[#allocation3 + $0x8] sm:$0xff] %vm323, 0.0
          %326 = vst.msk [vmem:[#allocation3 + $0x10] sm:$0xff] %vm323, 0.0
          %327 = vst.msk [vmem:[#allocation3 + $0x18] sm:$0xff] %vm323, 0.0
        $region56: #{tpu_custom_call.1} parent=35 // pred_fallthru
          _
        %v328 = vld [vmem:[%s261] sm:$0xff]
        %v329 = vld [vmem:[%s261 + $0x8] sm:$0xff]
        %v330 = vld [vmem:[%s261 + $0x10] sm:$0xff]
        %v331 = vld [vmem:[%s261 + $0x18] sm:$0xff]
        %vm332 = vcmask 254976
        %333 = vst.msk [vmem:[#allocation2] sm:$0x3] %vm332, 0
        %334 = vst.msk [vmem:[#allocation2 + $0xc] sm:$0x3] %vm332, 0
        %vm335 = vcmask 257026
        %336 = vst.msk [vmem:[#allocation2 + $0x8] sm:$0xc] %vm335, 0
        %337 = vst.msk [vmem:[#allocation2 + $0x14] sm:$0xc] %vm335, 0
        %v338 = vpack.c.bf16 %v328, %v328
        %v339 = vpack.c.bf16 %v329, %v329
        %v340 = vpack.c.bf16 %v330, %v330
        %v341 = vpack.c.bf16 %v331, %v331
        %vm346 = vcmask 1041408
        %vm347 = vcmask 1045508
        %vm348 = vmor %vm346, %vm347
        %v349 = vrot.slane %v338, 6
        %v350 = vrot.slane %v349, 4
        %v351 = vrot.slane %v339, 6
        %v352 = vsel %vm348, %v350, %v351
        %v353 = vrot.slane %v351, 4
        %v354 = vrot.slane %v340, 6
        %v355 = vrot.slane %v354, 4
        %v356 = vrot.slane %v341, 6
        %v357 = vsel %vm348, %v355, %v356
        %v358 = vrot.slane %v356, 4
        %365 = vst.msk [vmem:[#allocation2] sm:$0xc] %vm335, %v349
        %vm366 = vcmask 257024
        %367 = vst.msk [vmem:[#allocation2 + $0x4] sm:$0xf] %vm366, %v352
        %368 = vst.msk [vmem:[#allocation2 + $0x8] sm:$0x3] %vm332, %v353
        %369 = vst.msk [vmem:[#allocation2 + $0xc] sm:$0xc] %vm335, %v354
        %370 = vst.msk [vmem:[#allocation2 + $0x10] sm:$0xf] %vm366, %v357
        %371 = vst.msk [vmem:[#allocation2 + $0x14] sm:$0x3] %vm332, %v358
        %v372 = vld [vmem:[#allocation2] sm:$0xf]
        %v373 = vld [vmem:[#allocation2 + $0x4] sm:$0xf]
        %v374 = vld [vmem:[#allocation2 + $0xc] sm:$0xf]
        %v375 = vld [vmem:[#allocation2 + $0x10] sm:$0xf]
        %v376 = vld [vmem:[%s271] sm:$0xf]
        %v377 = vld [vmem:[%s271 + $0x4] sm:$0xf]
        %v378 = vld [vmem:[%s271 + $0x8] sm:$0xf]
        %v379 = vld [vmem:[%s271 + $0xc] sm:$0xf]
        %v380 = vld [vmem:[#allocation2 + $0x8] sm:$0x1]
        %v381 = vld [vmem:[#allocation2 + $0x14] sm:$0x1]
        %vm382 = vsmask.f32 3328
        %vm383 = vsmask.f32 7440
        %vm384 = vmor %vm382, %vm383
        %v386 = vshrl.u32 %v372, 16
        %v388 = vrot.slane %v386, 4
        %v389 = vshll.u32 %v372, 16
        %v391 = vrot.slane %v389, 5
        %v392 = vor.u32 %v388, %v391
        %v393 = vrot.slane %v392, 4
        %v395 = vshll.u32 %v373, 16
        %v397 = vrot.slane %v395, 5
        %v398 = vsel %vm384, %v393, %v397
        %v399 = vshrl.u32 %v373, 16
        %v401 = vrot.slane %v399, 4
        %v402 = vor.u32 %v401, %v397
        %v403 = vrot.slane %v402, 4
        %v405 = vshll.u32 %v380, 16
        %v407 = vrot.slane %v405, 5
        %v408 = vsel %vm384, %v403, %v407
        %v410 = vshrl.u32 %v374, 16
        %v412 = vrot.slane %v410, 4
        %v413 = vshll.u32 %v374, 16
        %v415 = vrot.slane %v413, 5
        %v416 = vor.u32 %v412, %v415
        %v417 = vrot.slane %v416, 4
        %v419 = vshll.u32 %v375, 16
        %v421 = vrot.slane %v419, 5
        %v422 = vsel %vm384, %v417, %v421
        %v423 = vshrl.u32 %v375, 16
        %v425 = vrot.slane %v423, 4
        %v426 = vor.u32 %v425, %v421
        %v427 = vrot.slane %v426, 4
        %v429 = vshll.u32 %v381, 16
        %v431 = vrot.slane %v429, 5
        %v432 = vsel %vm384, %v427, %v431
        %s433 = scalar_lea.vmem %s271, 16 [#allocation8]
        %v434 = vld [vmem:[%s433] sm:$0xf]
        %v435 = vld [vmem:[%s433 + $0x4] sm:$0xf]
        %v436 = vld [vmem:[%s433 + $0x8] sm:$0xf]
        %v437 = vld [vmem:[%s433 + $0xc] sm:$0xf]
        %v438 = vunpack.c.l.b16 %v398
        %v439 = vunpack.c.l.b16 %v408
        %v440 = vunpack.c.l.b16 %v422
        %v441 = vunpack.c.l.b16 %v432
        %v442 = vpack.c.b16 %v439, %v438
        %v443 = vpack.c.b16 %v441, %v440
        %v448 = vunpack.c.l.b16 %v434
        %v449 = vunpack.c.l.b16 %v435
        %v450 = vunpack.c.l.b16 %v436
        %v451 = vunpack.c.l.b16 %v437
        %v452 = vpack.c.b16 %v449, %v448
        %v453 = vpack.c.b16 %v451, %v450
        %vm456 = vcmask 261120
        %v458 = vsel %vm456, %v442, 0
        %v461 = vsel %vm456, %v443, 0
        %463 = vmatpush.bf16.msra.mxu0 0
        %464 = vmatpush.bf16.msra.mxu0 0
        %465 = vmatpush.bf16.msra.mxu0 0
        %466 = vmatpush.bf16.msra.mxu0 0
        %467 = vmatpush.bf16.msra.mxu0 0
        %468 = vmatpush.bf16.msra.mxu0 0
        %469 = vmatpush.bf16.msra.mxu0 %v453
        %470 = vmatpush.bf16.msra.mxu0 %v452
        %471 = vmatmul.bf16.gmra.mxu0 %v458
        %v472 = vpop.f32.mrf.mxu0
        %v473 = vadd.f32 0.0, %v472
        %v474 = vpop.f32.mrf.mxu0
        %v475 = vadd.f32 0.0, %v474
        %476 = vmatmul.bf16.gmra.mxu0 %v461
        %v477 = vpop.f32.mrf.mxu0
        %v478 = vadd.f32 0.0, %v477
        %v479 = vpop.f32.mrf.mxu0
        %v480 = vadd.f32 0.0, %v479
        %481 = vdwg.mxu0
        %v486 = vunpack.c.l.b16 %v372
        %v487 = vunpack.c.l.b16 %v373
        %v488 = vunpack.c.l.b16 %v374
        %v489 = vunpack.c.l.b16 %v375
        %v490 = vpack.c.b16 %v487, %v486
        %v491 = vpack.c.b16 %v489, %v488
        %v496 = vunpack.c.l.b16 %v376
        %v497 = vunpack.c.l.b16 %v377
        %v498 = vunpack.c.l.b16 %v378
        %v499 = vunpack.c.l.b16 %v379
        %v500 = vpack.c.b16 %v497, %v496
        %v501 = vpack.c.b16 %v499, %v498
        %v505 = vsel %vm456, %v490, 0
        %v508 = vsel %vm456, %v491, 0
        %510 = vmatpush.bf16.msra.mxu0 0
        %511 = vmatpush.bf16.msra.mxu0 0
        %512 = vmatpush.bf16.msra.mxu0 0
        %513 = vmatpush.bf16.msra.mxu0 0
        %514 = vmatpush.bf16.msra.mxu0 0
        %515 = vmatpush.bf16.msra.mxu0 0
        %516 = vmatpush.bf16.msra.mxu0 %v501
        %517 = vmatpush.bf16.msra.mxu0 %v500
        %518 = vmatmul.bf16.gmra.mxu0 %v505
        %v519 = vpop.f32.mrf.mxu0
        %v520 = vadd.f32 %v473, %v519
        %v521 = vpop.f32.mrf.mxu0
        %v522 = vadd.f32 %v475, %v521
        %523 = vmatmul.bf16.gmra.mxu0 %v508
        %v524 = vpop.f32.mrf.mxu0
        %v525 = vadd.f32 %v478, %v524
        %v526 = vpop.f32.mrf.mxu0
        %v527 = vadd.f32 %v480, %v526
        %528 = vdwg.mxu0
        %v529 = vld [vmem:[#allocation2] sm:$0xe]
        %v530 = vld [vmem:[#allocation2 + $0xc] sm:$0xe]
        %vm535 = vcmask 1042432
        %vm536 = vcmask 1046532
        %vm537 = vmor %vm535, %vm536
        %v538 = vrot.slane %v529, 5
        %v539 = vrot.slane %v538, 4
        %v540 = vrot.slane %v373, 5
        %v541 = vsel %vm537, %v539, %v540
        %v542 = vrot.slane %v540, 4
        %v543 = vrot.slane %v380, 5
        %v544 = vsel %vm537, %v542, %v543
        %v545 = vrot.slane %v530, 5
        %v546 = vrot.slane %v545, 4
        %v547 = vrot.slane %v375, 5
        %v548 = vsel %vm537, %v546, %v547
        %v549 = vrot.slane %v547, 4
        %v550 = vrot.slane %v381, 5
        %v551 = vsel %vm537, %v549, %v550
        %s552 = scalar_lea.vmem %s271, 32 [#allocation8]
        %v553 = vld [vmem:[%s552] sm:$0xf]
        %v554 = vld [vmem:[%s552 + $0x4] sm:$0xf]
        %v555 = vld [vmem:[%s552 + $0x8] sm:$0xf]
        %v556 = vld [vmem:[%s552 + $0xc] sm:$0xf]
        %v557 = vunpack.c.l.b16 %v541
        %v558 = vunpack.c.l.b16 %v544
        %v559 = vunpack.c.l.b16 %v548
        %v560 = vunpack.c.l.b16 %v551
        %v561 = vpack.c.b16 %v558, %v557
        %v562 = vpack.c.b16 %v560, %v559
        %v567 = vunpack.c.l.b16 %v553
        %v568 = vunpack.c.l.b16 %v554
        %v569 = vunpack.c.l.b16 %v555
        %v570 = vunpack.c.l.b16 %v556
        %v571 = vpack.c.b16 %v568, %v567
        %v572 = vpack.c.b16 %v570, %v569
        %v576 = vsel %vm456, %v561, 0
        %v579 = vsel %vm456, %v562, 0
        %581 = vmatpush.bf16.msra.mxu0 0
        %582 = vmatpush.bf16.msra.mxu0 0
        %583 = vmatpush.bf16.msra.mxu0 0
        %584 = vmatpush.bf16.msra.mxu0 0
        %585 = vmatpush.bf16.msra.mxu0 0
        %586 = vmatpush.bf16.msra.mxu0 0
        %587 = vmatpush.bf16.msra.mxu0 %v572
        %588 = vmatpush.bf16.msra.mxu0 %v571
        %589 = vmatmul.bf16.gmra.mxu0 %v576
        %v590 = vpop.f32.mrf.mxu0
        %v591 = vadd.f32 0.0, %v590
        %v592 = vpop.f32.mrf.mxu0
        %v593 = vadd.f32 0.0, %v592
        %594 = vmatmul.bf16.gmra.mxu0 %v579
        %v595 = vpop.f32.mrf.mxu0
        %v596 = vadd.f32 0.0, %v595
        %v597 = vpop.f32.mrf.mxu0
        %v598 = vadd.f32 0.0, %v597
        %599 = vdwg.mxu0
        %v600 = vadd.f32 %v520, %v591
        %v601 = vadd.f32 %v522, %v593
        %v602 = vadd.f32 %v525, %v596
        %v603 = vadd.f32 %v527, %v598
        %v604 = vld [vmem:[#allocation2 + $0x8] sm:$0x3]
        %v605 = vld [vmem:[#allocation2 + $0x14] sm:$0x3]
        %vm606 = vsmask.f32 2304
        %vm607 = vsmask.f32 6416
        %vm608 = vmor %vm606, %vm607
        %v610 = vshrl.u32 %v529, 16
        %v612 = vrot.slane %v610, 5
        %v613 = vshll.u32 %v529, 16
        %v615 = vrot.slane %v613, 6
        %v616 = vor.u32 %v612, %v615
        %v617 = vrot.slane %v616, 4
        %v618 = vrot.slane %v399, 5
        %v619 = vrot.slane %v395, 6
        %v620 = vor.u32 %v618, %v619
        %v621 = vsel %vm608, %v617, %v620
        %v622 = vrot.slane %v620, 4
        %v624 = vshrl.u32 %v604, 16
        %v626 = vrot.slane %v624, 5
        %v627 = vshll.u32 %v604, 16
        %v629 = vrot.slane %v627, 6
        %v630 = vor.u32 %v626, %v629
        %v631 = vsel %vm608, %v622, %v630
        %v633 = vshrl.u32 %v530, 16
        %v635 = vrot.slane %v633, 5
        %v636 = vshll.u32 %v530, 16
        %v638 = vrot.slane %v636, 6
        %v639 = vor.u32 %v635, %v638
        %v640 = vrot.slane %v639, 4
        %v641 = vrot.slane %v423, 5
        %v642 = vrot.slane %v419, 6
        %v643 = vor.u32 %v641, %v642
        %v644 = vsel %vm608, %v640, %v643
        %v645 = vrot.slane %v643, 4
        %v647 = vshrl.u32 %v605, 16
        %v649 = vrot.slane %v647, 5
        %v650 = vshll.u32 %v605, 16
        %v652 = vrot.slane %v650, 6
        %v653 = vor.u32 %v649, %v652
        %v654 = vsel %vm608, %v645, %v653
        %s655 = scalar_lea.vmem %s271, 48 [#allocation8]
        %v656 = vld [vmem:[%s655] sm:$0xf]
        %v657 = vld [vmem:[%s655 + $0x4] sm:$0xf]
        %v658 = vld [vmem:[%s655 + $0x8] sm:$0xf]
        %v659 = vld [vmem:[%s655 + $0xc] sm:$0xf]
        %v660 = vunpack.c.l.b16 %v621
        %v661 = vunpack.c.l.b16 %v631
        %v662 = vunpack.c.l.b16 %v644
        %v663 = vunpack.c.l.b16 %v654
        %v664 = vpack.c.b16 %v661, %v660
        %v665 = vpack.c.b16 %v663, %v662
        %v670 = vunpack.c.l.b16 %v656
        %v671 = vunpack.c.l.b16 %v657
        %v672 = vunpack.c.l.b16 %v658
        %v673 = vunpack.c.l.b16 %v659
        %v674 = vpack.c.b16 %v671, %v670
        %v675 = vpack.c.b16 %v673, %v672
        %v679 = vsel %vm456, %v664, 0
        %v682 = vsel %vm456, %v665, 0
        %684 = vmatpush.bf16.msra.mxu0 0
        %685 = vmatpush.bf16.msra.mxu0 0
        %686 = vmatpush.bf16.msra.mxu0 0
        %687 = vmatpush.bf16.msra.mxu0 0
        %688 = vmatpush.bf16.msra.mxu0 0
        %689 = vmatpush.bf16.msra.mxu0 0
        %690 = vmatpush.bf16.msra.mxu0 %v675
        %691 = vmatpush.bf16.msra.mxu0 %v674
        %692 = vmatmul.bf16.gmra.mxu0 %v679
        %v693 = vpop.f32.mrf.mxu0
        %v694 = vadd.f32 0.0, %v693
        %v695 = vpop.f32.mrf.mxu0
        %v696 = vadd.f32 0.0, %v695
        %697 = vmatmul.bf16.gmra.mxu0 %v682
        %v698 = vpop.f32.mrf.mxu0
        %v699 = vadd.f32 0.0, %v698
        %v700 = vpop.f32.mrf.mxu0
        %v701 = vadd.f32 0.0, %v700
        %702 = vdwg.mxu0
        %v703 = vadd.f32 %v600, %v694
        %v704 = vadd.f32 %v601, %v696
        %v705 = vadd.f32 %v602, %v699
        %v706 = vadd.f32 %v603, %v701
        %v707 = vld [vmem:[#allocation2] sm:$0xc]
        %v708 = vld [vmem:[#allocation2 + $0xc] sm:$0xc]
        %v713 = vrot.slane %v707, 6
        %v714 = vrot.slane %v713, 4
        %v715 = vrot.slane %v373, 6
        %v716 = vsel %vm348, %v714, %v715
        %v717 = vrot.slane %v715, 4
        %v718 = vrot.slane %v604, 6
        %v719 = vsel %vm348, %v717, %v718
        %v720 = vrot.slane %v708, 6
        %v721 = vrot.slane %v720, 4
        %v722 = vrot.slane %v375, 6
        %v723 = vsel %vm348, %v721, %v722
        %v724 = vrot.slane %v722, 4
        %v725 = vrot.slane %v605, 6
        %v726 = vsel %vm348, %v724, %v725
        %s727 = scalar_lea.vmem %s271, 64 [#allocation8]
        %v728 = vld [vmem:[%s727] sm:$0xf]
        %v729 = vld [vmem:[%s727 + $0x4] sm:$0xf]
        %v730 = vld [vmem:[%s727 + $0x8] sm:$0xf]
        %v731 = vld [vmem:[%s727 + $0xc] sm:$0xf]
        %v732 = vunpack.c.l.b16 %v716
        %v733 = vunpack.c.l.b16 %v719
        %v734 = vunpack.c.l.b16 %v723
        %v735 = vunpack.c.l.b16 %v726
        %v736 = vpack.c.b16 %v733, %v732
        %v737 = vpack.c.b16 %v735, %v734
        %v742 = vunpack.c.l.b16 %v728
        %v743 = vunpack.c.l.b16 %v729
        %v744 = vunpack.c.l.b16 %v730
        %v745 = vunpack.c.l.b16 %v731
        %v746 = vpack.c.b16 %v743, %v742
        %v747 = vpack.c.b16 %v745, %v744
        %v751 = vsel %vm456, %v736, 0
        %v754 = vsel %vm456, %v737, 0
        %756 = vmatpush.bf16.msra.mxu0 0
        %757 = vmatpush.bf16.msra.mxu0 0
        %758 = vmatpush.bf16.msra.mxu0 0
        %759 = vmatpush.bf16.msra.mxu0 0
        %760 = vmatpush.bf16.msra.mxu0 0
        %761 = vmatpush.bf16.msra.mxu0 0
        %762 = vmatpush.bf16.msra.mxu0 %v747
        %763 = vmatpush.bf16.msra.mxu0 %v746
        %764 = vmatmul.bf16.gmra.mxu0 %v751
        %v765 = vpop.f32.mrf.mxu0
        %v766 = vadd.f32 0.0, %v765
        %v767 = vpop.f32.mrf.mxu0
        %v768 = vadd.f32 0.0, %v767
        %769 = vmatmul.bf16.gmra.mxu0 %v754
        %v770 = vpop.f32.mrf.mxu0
        %v771 = vadd.f32 0.0, %v770
        %v772 = vpop.f32.mrf.mxu0
        %v773 = vadd.f32 0.0, %v772
        %774 = vdwg.mxu0
        %v775 = vadd.f32 %v703, %v766
        %v776 = vadd.f32 %v704, %v768
        %v777 = vadd.f32 %v705, %v771
        %v778 = vadd.f32 %v706, %v773
        %v779 = vld [vmem:[#allocation2 + $0x8] sm:$0x7]
        %v780 = vld [vmem:[#allocation2 + $0x14] sm:$0x7]
        %vm781 = vsmask.f32 1280
        %vm782 = vsmask.f32 5392
        %vm783 = vmor %vm781, %vm782
        %v785 = vshrl.u32 %v707, 16
        %v787 = vrot.slane %v785, 6
        %v788 = vshll.u32 %v707, 16
        %v790 = vrot.slane %v788, 7
        %v791 = vor.u32 %v787, %v790
        %v792 = vrot.slane %v791, 4
        %v793 = vrot.slane %v399, 6
        %v794 = vrot.slane %v395, 7
        %v795 = vor.u32 %v793, %v794
        %v796 = vsel %vm783, %v792, %v795
        %v797 = vrot.slane %v795, 4
        %v799 = vshrl.u32 %v779, 16
        %v801 = vrot.slane %v799, 6
        %v802 = vshll.u32 %v779, 16
        %v804 = vrot.slane %v802, 7
        %v805 = vor.u32 %v801, %v804
        %v806 = vsel %vm783, %v797, %v805
        %v808 = vshrl.u32 %v708, 16
        %v810 = vrot.slane %v808, 6
        %v811 = vshll.u32 %v708, 16
        %v813 = vrot.slane %v811, 7
        %v814 = vor.u32 %v810, %v813
        %v815 = vrot.slane %v814, 4
        %v816 = vrot.slane %v423, 6
        %v817 = vrot.slane %v419, 7
        %v818 = vor.u32 %v816, %v817
        %v819 = vsel %vm783, %v815, %v818
        %v820 = vrot.slane %v818, 4
        %v822 = vshrl.u32 %v780, 16
        %v824 = vrot.slane %v822, 6
        %v825 = vshll.u32 %v780, 16
        %v827 = vrot.slane %v825, 7
        %v828 = vor.u32 %v824, %v827
        %v829 = vsel %vm783, %v820, %v828
        %s830 = scalar_lea.vmem %s271, 80 [#allocation8]
        %v831 = vld [vmem:[%s830] sm:$0xf]
        %v832 = vld [vmem:[%s830 + $0x4] sm:$0xf]
        %v833 = vld [vmem:[%s830 + $0x8] sm:$0xf]
        %v834 = vld [vmem:[%s830 + $0xc] sm:$0xf]
        %v835 = vunpack.c.l.b16 %v796
        %v836 = vunpack.c.l.b16 %v806
        %v837 = vunpack.c.l.b16 %v819
        %v838 = vunpack.c.l.b16 %v829
        %v839 = vpack.c.b16 %v836, %v835
        %v840 = vpack.c.b16 %v838, %v837
        %v845 = vunpack.c.l.b16 %v831
        %v846 = vunpack.c.l.b16 %v832
        %v847 = vunpack.c.l.b16 %v833
        %v848 = vunpack.c.l.b16 %v834
        %v849 = vpack.c.b16 %v846, %v845
        %v850 = vpack.c.b16 %v848, %v847
        %v854 = vsel %vm456, %v839, 0
        %v857 = vsel %vm456, %v840, 0
        %859 = vmatpush.bf16.msra.mxu0 0
        %860 = vmatpush.bf16.msra.mxu0 0
        %861 = vmatpush.bf16.msra.mxu0 0
        %862 = vmatpush.bf16.msra.mxu0 0
        %863 = vmatpush.bf16.msra.mxu0 0
        %864 = vmatpush.bf16.msra.mxu0 0
        %865 = vmatpush.bf16.msra.mxu0 %v850
        %866 = vmatpush.bf16.msra.mxu0 %v849
        %867 = vmatmul.bf16.gmra.mxu0 %v854
        %v868 = vpop.f32.mrf.mxu0
        %v869 = vadd.f32 0.0, %v868
        %v870 = vpop.f32.mrf.mxu0
        %v871 = vadd.f32 0.0, %v870
        %872 = vmatmul.bf16.gmra.mxu0 %v857
        %v873 = vpop.f32.mrf.mxu0
        %v874 = vadd.f32 0.0, %v873
        %v875 = vpop.f32.mrf.mxu0
        %v876 = vadd.f32 0.0, %v875
        %877 = vdwg.mxu0
        %v878 = vadd.f32 %v775, %v869
        %v879 = vadd.f32 %v776, %v871
        %v880 = vadd.f32 %v777, %v874
        %v881 = vadd.f32 %v778, %v876
        %v882 = vld [vmem:[#allocation2] sm:$0x8]
        %v883 = vld [vmem:[#allocation2 + $0xc] sm:$0x8]
        %vm888 = vcmask 1040384
        %vm889 = vcmask 1044484
        %vm890 = vmor %vm888, %vm889
        %v891 = vrot.slane %v882, 7
        %v892 = vrot.slane %v891, 4
        %v893 = vrot.slane %v373, 7
        %v894 = vsel %vm890, %v892, %v893
        %v895 = vrot.slane %v893, 4
        %v896 = vrot.slane %v779, 7
        %v897 = vsel %vm890, %v895, %v896
        %v898 = vrot.slane %v883, 7
        %v899 = vrot.slane %v898, 4
        %v900 = vrot.slane %v375, 7
        %v901 = vsel %vm890, %v899, %v900
        %v902 = vrot.slane %v900, 4
        %v903 = vrot.slane %v780, 7
        %v904 = vsel %vm890, %v902, %v903
        %s905 = scalar_lea.vmem %s271, 96 [#allocation8]
        %v906 = vld [vmem:[%s905] sm:$0xf]
        %v907 = vld [vmem:[%s905 + $0x4] sm:$0xf]
        %v908 = vld [vmem:[%s905 + $0x8] sm:$0xf]
        %v909 = vld [vmem:[%s905 + $0xc] sm:$0xf]
        %v910 = vunpack.c.l.b16 %v894
        %v911 = vunpack.c.l.b16 %v897
        %v912 = vunpack.c.l.b16 %v901
        %v913 = vunpack.c.l.b16 %v904
        %v914 = vpack.c.b16 %v911, %v910
        %v915 = vpack.c.b16 %v913, %v912
        %v920 = vunpack.c.l.b16 %v906
        %v921 = vunpack.c.l.b16 %v907
        %v922 = vunpack.c.l.b16 %v908
        %v923 = vunpack.c.l.b16 %v909
        %v924 = vpack.c.b16 %v921, %v920
        %v925 = vpack.c.b16 %v923, %v922
        %v929 = vsel %vm456, %v914, 0
        %v932 = vsel %vm456, %v915, 0
        %934 = vmatpush.bf16.msra.mxu0 0
        %935 = vmatpush.bf16.msra.mxu0 0
        %936 = vmatpush.bf16.msra.mxu0 0
        %937 = vmatpush.bf16.msra.mxu0 0
        %938 = vmatpush.bf16.msra.mxu0 0
        %939 = vmatpush.bf16.msra.mxu0 0
        %940 = vmatpush.bf16.msra.mxu0 %v925
        %941 = vmatpush.bf16.msra.mxu0 %v924
        %942 = vmatmul.bf16.gmra.mxu0 %v929
        %v943 = vpop.f32.mrf.mxu0
        %v944 = vadd.f32 0.0, %v943
        %v945 = vpop.f32.mrf.mxu0
        %v946 = vadd.f32 0.0, %v945
        %947 = vmatmul.bf16.gmra.mxu0 %v932
        %v948 = vpop.f32.mrf.mxu0
        %v949 = vadd.f32 0.0, %v948
        %v950 = vpop.f32.mrf.mxu0
        %v951 = vadd.f32 0.0, %v950
        %952 = vdwg.mxu0
        %v953 = vadd.f32 %v878, %v944
        %v954 = vadd.f32 %v879, %v946
        %v955 = vadd.f32 %v880, %v949
        %v956 = vadd.f32 %v881, %v951
        %v957 = vld [vmem:[#allocation2 + $0x8] sm:$0xf]
        %v958 = vld [vmem:[#allocation2 + $0x14] sm:$0xf]
        %vm959 = vsmask.f32 256
        %vm960 = vsmask.f32 4368
        %vm961 = vmor %vm959, %vm960
        %v963 = vshrl.u32 %v882, 16
        %v965 = vrot.slane %v963, 7
        %v966 = vrot.slane %v965, 4
        %v967 = vrot.slane %v399, 7
        %v968 = vor.u32 %v967, %v395
        %v969 = vsel %vm961, %v966, %v968
        %v970 = vrot.slane %v967, 4
        %v972 = vshrl.u32 %v957, 16
        %v974 = vrot.slane %v972, 7
        %v975 = vshll.u32 %v957, 16
        %v977 = vor.u32 %v974, %v975
        %v978 = vsel %vm961, %v970, %v977
        %v980 = vshrl.u32 %v883, 16
        %v982 = vrot.slane %v980, 7
        %v983 = vrot.slane %v982, 4
        %v984 = vrot.slane %v423, 7
        %v985 = vor.u32 %v984, %v419
        %v986 = vsel %vm961, %v983, %v985
        %v987 = vrot.slane %v984, 4
        %v989 = vshrl.u32 %v958, 16
        %v991 = vrot.slane %v989, 7
        %v992 = vshll.u32 %v958, 16
        %v994 = vor.u32 %v991, %v992
        %v995 = vsel %vm961, %v987, %v994
        %s996 = scalar_lea.vmem %s271, 112 [#allocation8]
        %v997 = vld [vmem:[%s996] sm:$0xf]
        %v998 = vld [vmem:[%s996 + $0x4] sm:$0xf]
        %v999 = vld [vmem:[%s996 + $0x8] sm:$0xf]
        %v1000 = vld [vmem:[%s996 + $0xc] sm:$0xf]
        %v1001 = vunpack.c.l.b16 %v969
        %v1002 = vunpack.c.l.b16 %v978
        %v1003 = vunpack.c.l.b16 %v986
        %v1004 = vunpack.c.l.b16 %v995
        %v1005 = vpack.c.b16 %v1002, %v1001
        %v1006 = vpack.c.b16 %v1004, %v1003
        %v1011 = vunpack.c.l.b16 %v997
        %v1012 = vunpack.c.l.b16 %v998
        %v1013 = vunpack.c.l.b16 %v999
        %v1014 = vunpack.c.l.b16 %v1000
        %v1015 = vpack.c.b16 %v1012, %v1011
        %v1016 = vpack.c.b16 %v1014, %v1013
        %v1020 = vsel %vm456, %v1005, 0
        %v1023 = vsel %vm456, %v1006, 0
        %1025 = vmatpush.bf16.msra.mxu0 0
        %1026 = vmatpush.bf16.msra.mxu0 0
        %1027 = vmatpush.bf16.msra.mxu0 0
        %1028 = vmatpush.bf16.msra.mxu0 0
        %1029 = vmatpush.bf16.msra.mxu0 0
        %1030 = vmatpush.bf16.msra.mxu0 0
        %1031 = vmatpush.bf16.msra.mxu0 %v1016
        %1032 = vmatpush.bf16.msra.mxu0 %v1015
        %1033 = vmatmul.bf16.gmra.mxu0 %v1020
        %v1034 = vpop.f32.mrf.mxu0
        %v1035 = vadd.f32 0.0, %v1034
        %v1036 = vpop.f32.mrf.mxu0
        %v1037 = vadd.f32 0.0, %v1036
        %1038 = vmatmul.bf16.gmra.mxu0 %v1023
        %v1039 = vpop.f32.mrf.mxu0
        %v1040 = vadd.f32 0.0, %v1039
        %v1041 = vpop.f32.mrf.mxu0
        %v1042 = vadd.f32 0.0, %v1041
        %1043 = vdwg.mxu0
        %v1044 = vadd.f32 %v953, %v1035
        %v1045 = vadd.f32 %v954, %v1037
        %v1046 = vadd.f32 %v955, %v1040
        %v1047 = vadd.f32 %v956, %v1042
        %s1048 = scalar_lea.vmem %s271, 128 [#allocation8]
        %v1049 = vld [vmem:[%s1048] sm:$0xf]
        %v1050 = vld [vmem:[%s1048 + $0x4] sm:$0xf]
        %v1051 = vld [vmem:[%s1048 + $0x8] sm:$0xf]
        %v1052 = vld [vmem:[%s1048 + $0xc] sm:$0xf]
        %v1055 = vunpack.c.l.b16 %v957
        %v1056 = vunpack.c.l.b16 %v958
        %v1057 = vpack.c.b16 %v1055, %v487
        %v1058 = vpack.c.b16 %v1056, %v489
        %v1063 = vunpack.c.l.b16 %v1049
        %v1064 = vunpack.c.l.b16 %v1050
        %v1065 = vunpack.c.l.b16 %v1051
        %v1066 = vunpack.c.l.b16 %v1052
        %v1067 = vpack.c.b16 %v1064, %v1063
        %v1068 = vpack.c.b16 %v1066, %v1065
        %v1072 = vsel %vm456, %v1057, 0
        %v1075 = vsel %vm456, %v1058, 0
        %1077 = vmatpush.bf16.msra.mxu0 0
        %1078 = vmatpush.bf16.msra.mxu0 0
        %1079 = vmatpush.bf16.msra.mxu0 0
        %1080 = vmatpush.bf16.msra.mxu0 0
        %1081 = vmatpush.bf16.msra.mxu0 0
        %1082 = vmatpush.bf16.msra.mxu0 0
        %1083 = vmatpush.bf16.msra.mxu0 %v1068
        %1084 = vmatpush.bf16.msra.mxu0 %v1067
        %1085 = vmatmul.bf16.gmra.mxu0 %v1072
        %v1086 = vpop.f32.mrf.mxu0
        %v1087 = vadd.f32 0.0, %v1086
        %v1088 = vpop.f32.mrf.mxu0
        %v1089 = vadd.f32 0.0, %v1088
        %1090 = vmatmul.bf16.gmra.mxu0 %v1075
        %v1091 = vpop.f32.mrf.mxu0
        %v1092 = vadd.f32 0.0, %v1091
        %v1093 = vpop.f32.mrf.mxu0
        %v1094 = vadd.f32 0.0, %v1093
        %1095 = vdwg.mxu0
        %v1096 = vadd.f32 %v1044, %v1087
        %v1097 = vadd.f32 %v1045, %v1089
        %v1098 = vadd.f32 %v1046, %v1092
        %v1099 = vadd.f32 %v1047, %v1094
        %v1100 = vld [vmem:[%s280] sm:$0x1]
        %v1102 = vperm.slane %v1100, 0
        %v1104 = vadd.f32 %v1096, %v1102
        %v1105 = vadd.f32 %v1097, %v1102
        %v1106 = vadd.f32 %v1098, %v1102
        %v1107 = vadd.f32 %v1099, %v1102
        %v1108 = vmax.f32 %v1104, 0.0
        %v1109 = vmax.f32 %v1105, 0.0
        %v1110 = vmax.f32 %v1106, 0.0
        %v1111 = vmax.f32 %v1107, 0.0
        %v1112 = vld [vmem:[#allocation3] sm:$0xff]
        %v1113 = vld [vmem:[#allocation3 + $0x8] sm:$0xff]
        %v1114 = vld [vmem:[#allocation3 + $0x10] sm:$0xff]
        %v1115 = vld [vmem:[#allocation3 + $0x18] sm:$0xff]
        %s1116 = sld [smem:[#allocation11 + %s28]]
        %v1117 = vstv %s1116
        %v1118 = vmul.f32 %v1117, %v1108
        %v1119 = vmul.f32 %v1117, %v1109
        %v1120 = vmul.f32 %v1117, %v1110
        %v1121 = vmul.f32 %v1117, %v1111
        %v1122 = vadd.f32 %v1112, %v1118
        %v1123 = vadd.f32 %v1113, %v1119
        %v1124 = vadd.f32 %v1114, %v1120
        %v1125 = vadd.f32 %v1115, %v1121
        %1126 = vst.msk [vmem:[#allocation3] sm:$0xff] %vm456, %v1122
        %1127 = vst.msk [vmem:[#allocation3 + $0x8] sm:$0xff] %vm456, %v1123
        %1128 = vst.msk [vmem:[#allocation3 + $0x10] sm:$0xff] %vm456, %v1124
        %1129 = vst.msk [vmem:[#allocation3 + $0x18] sm:$0xff] %vm456, %v1125
        %p1130 = scmp.eq.s32.totalorder %s28, 3
        // Predicated region
        $region57: #{tpu_custom_call.1} parent=35 // pred_check
          %p1131 = pneg %p1130
        $region58: #{tpu_custom_call.1} parent=35 // pred_check_branch
          %1133 = sbr.rel (%p1131) target = $region60
        $region59: #{tpu_custom_call.1} parent=35 // pred_region
          %v1134 = vld [vmem:[#allocation3] sm:$0xff]
          %v1135 = vld [vmem:[#allocation3 + $0x8] sm:$0xff]
          %v1136 = vld [vmem:[#allocation3 + $0x10] sm:$0xff]
          %v1137 = vld [vmem:[#allocation3 + $0x18] sm:$0xff]
          %v1138 = vpack.c.bf16 %v1134, %v1134
          %v1139 = vpack.c.bf16 %v1135, %v1135
          %v1140 = vpack.c.bf16 %v1136, %v1136
          %v1141 = vpack.c.bf16 %v1137, %v1137
          %1142 = vst.msk [vmem:[#allocation12] sm:$0xf] %vm366, %v1138
          %1143 = vst.msk [vmem:[#allocation12 + $0x4] sm:$0xf] %vm366, %v1139
          %1144 = vst.msk [vmem:[#allocation12 + $0x8] sm:$0xf] %vm366, %v1140
          %1145 = vst.msk [vmem:[#allocation12 + $0xc] sm:$0xf] %vm366, %v1141
        $region60: #{tpu_custom_call.1} parent=35 // pred_fallthru
          _
        // Predicated region
        $region61: #{tpu_custom_call.1} parent=35 // pred_check
          %p1146 = pneg %p154
        $region62: #{tpu_custom_call.1} parent=35 // pred_check_branch
          %1148 = sbr.rel (%p1146) target = $region64
        $region63: #{tpu_custom_call.1} parent=35 // pred_region
          %s1149 = smul.u32 2, %s27
          %1151 = vsyncadd [#allocation6], 0
          %s1152 = smul.addr %s1149, 2
          %s1153 = smul.addr %s1152, 4
          %s1154 = scalar_lea.hbm %s4, %s1153
          %s1155 = sshll.u32 [#allocation12], 4
          %s1156 = int_to_ptr.vmem [resolvable:$true] %s1155
          %s1157 = sshll.u32 %s1154, 4
          %s1158 = int_to_ptr.hbm [resolvable:$true] %s1157
          %1163 = dma.vmem_to_hbm [thread:$0]  %s1156, 256, %s1158, [#allocation6], 64, 64, 4
        $region64: #{tpu_custom_call.1} parent=35 // pred_fallthru
          _
        // Predicated region
        $region65: #{tpu_custom_call.1} parent=35 // pred_check
          %p1164 = pneg %p154
        $region66: #{tpu_custom_call.1} parent=35 // pred_check_branch
          %1166 = sbr.rel (%p1164) target = $region68
        $region67: #{tpu_custom_call.1} parent=35 // pred_region
          %1168 = dma.done [#allocation6], 256
        $region68: #{tpu_custom_call.1} parent=35 // pred_fallthru
          _
      $region36: #{tpu_custom_call.1} parent=5 // pred_fallthru
        _
      %p1169 = scmp.le.s32.totalorder 2, %s18
      // Predicated region
      $region69: #{tpu_custom_call.1} parent=5 // pred_check
        %p1170 = pneg %p1169
      $region70: #{tpu_custom_call.1} parent=5 // pred_check_branch
        %1172 = sbr.rel (%p1170) target = $region72
      $region71: #{tpu_custom_call.1} parent=5 // pred_region
        %s1173 = ssub.s32 %s18, 2
      $region72: #{tpu_custom_call.1} parent=5 // pred_fallthru
        _
    $region6: #{tpu_custom_call.1} parent=1 // loop_footer
      %s22 = sadd.s32 1, %s18
    $region7: #{tpu_custom_call.1} parent=1 // loop_footer_branch
      %17 = sbr.rel target = $region3
    $region8: #{tpu_custom_call.1} parent=1 // loop_exit
      _
    %1174 = vsyncpa [#allocation5], 1
    %s1175 = scalar_lea.sflag [#allocation5], 1
    %1176 = vsyncpa %s1175, 1
    %1177 = vsyncpa [#allocation9], 1
    %s1178 = scalar_lea.sflag [#allocation9], 1
    %1179 = vsyncpa %s1178, 1
    %1180 = vsyncpa [#allocation6], 1
    %s1181 = scalar_lea.sflag [#allocation6], 1
    %1182 = vsyncpa %s1181, 1
    %1183 = vsyncpa [#allocation7], 1
    %s1184 = scalar_lea.sflag [#allocation7], 1
    %1185 = vsyncpa %s1184, 1

</llo_original>
